<compile_context>
chip_gen: v7x
topology: tpu7x:2x2x1
jax: 0.10.0
libtpu: 0.0.40
codegen_flags: <defaults>
</compile_context>

<pallas_src>
import functools

import jax
import jax.numpy as jnp
import numpy as np
from jax.experimental import pallas as pl
from jax.experimental.pallas import tpu as pltpu


NEG_BIG = 1e30        # additive mask bias magnitude (safe with f32 max-subtraction)
OUT_LANES = 128       # lane-dense output width (>= dim, multiple of 128)


def _mca_kernel(x_ref, media_ref, bias_ref, gamma_ref, beta_ref,
                wq_ref, wkv_ref, wo_ref, o_ref, *,
                b_blk, t_txt, heads, dim_head, eps):
    """One grid step: b_blk batch elements, full text length, full media length."""
    inner = heads * dim_head

    # ---- LayerNorm over `dim` (f32 VPU math), all b_blk*T rows at once ----
    x = x_ref[...].astype(jnp.float32)                        # (b_blk*T, dim)
    mu = jnp.mean(x, axis=-1, keepdims=True)
    var = jnp.mean(jnp.square(x - mu), axis=-1, keepdims=True)
    xn = (x - mu) * jax.lax.rsqrt(var + eps)
    xn = xn * gamma_ref[...] + beta_ref[...]                  # (1, dim) broadcasts

    # ---- to_q for the whole block (dim_head**-0.5 pre-folded into W_q) ----
    q = jnp.dot(xn.astype(jnp.bfloat16), wq_ref[...],
                preferred_element_type=jnp.float32)           # (b_blk*T, inner) f32

    # hoist weight loads out of the unrolled loops (JAX does not CSE them)
    wkv = wkv_ref[...]                                        # (dim_audio, 2*inner) bf16
    wo = wo_ref[...]                                          # (inner, OUT_LANES) bf16

    contract_last = (((1,), (1,)), ((), ()))                  # q . k over dim_head

    # static unroll over batches in the block and heads — aligned slices, no transposes
    for b in range(b_blk):
        q_b = q[b * t_txt:(b + 1) * t_txt, :]                 # (T, inner), sublane-aligned
        kv_b = jnp.dot(media_ref[b], wkv,
                       preferred_element_type=jnp.float32)    # (L, 2*inner) f32
        bias_b = bias_ref[b:b + 1, :]                         # (1, L): 0 attend, -NEG_BIG masked

        acc = jnp.zeros((t_txt, o_ref.shape[-1]), jnp.float32)
        for h in range(heads):
            lo = h * dim_head
            hi = lo + dim_head
            # scores: (T, d) . (L, d)^T -> (T, L), bf16 operands, f32 accumulation
            sim = jax.lax.dot_general(
                q_b[:, lo:hi].astype(jnp.bfloat16),
                kv_b[:, lo:hi].astype(jnp.bfloat16),          # k head slice
                contract_last, preferred_element_type=jnp.float32)
            sim = sim + bias_b                                # additive media mask
            m = jnp.max(sim, axis=-1, keepdims=True)
            p = jnp.exp(sim - m)
            l = jnp.sum(p, axis=-1, keepdims=True)
            attn = p * pl.reciprocal(l, approx=True)          # divide on the EUP slot
            out_h = jnp.dot(attn.astype(jnp.bfloat16),
                            kv_b[:, inner + lo:inner + hi].astype(jnp.bfloat16),  # v slice
                            preferred_element_type=jnp.float32)                   # (T, d)
            # to_out done per head and summed: concat_h(out_h) @ W_o == sum_h out_h @ W_o[h]
            acc = acc + jnp.dot(out_h.astype(jnp.bfloat16), wo[lo:hi, :],
                                preferred_element_type=jnp.float32)   # (T, OUT_LANES)
        # full-128-lane, sublane-aligned, unmasked store
        o_ref[b * t_txt:(b + 1) * t_txt, :] = acc.astype(o_ref.dtype)


def masked_cross_attention(x, media, media_mask, params, *, heads, dim_head,
                           eps=1e-5, b_block=None):
    """x: (B,T,dim) f32; media: (B,L,1,dim_audio); media_mask: (B,L,1) bool.
    params = (gamma, beta, wq, wkv, wo) with weights stored as (in, out).
    Implements the only_attend_immediate_media=False branch of the PyTorch forward."""
    gamma, beta, wq, wkv, wo = params
    B, T, dim = x.shape
    L = media.shape[1]
    dim_audio = media.shape[-1]
    inner = heads * dim_head
    assert media.shape[2] == 1

    b_blk = B if b_block is None else b_block
    assert B % b_blk == 0
    # mask/x BlockSpecs need the batch block to be sublane-friendly or cover the full batch
    assert b_blk == B or b_blk % 8 == 0
    n_blocks = B // b_blk

    # ---- wrapper-side layout & parameter prep (one-time / trivially cheap XLA ops) ----
    x2 = x.reshape(B * T, dim)                                      # rows = batch*text
    media3 = media.reshape(B, L, dim_audio).astype(jnp.bfloat16)    # 'b t n d -> b (t n) d'
    # additive attention bias: 0 where attend, -NEG_BIG where masked ('b i n -> b (i n)')
    bias = (media_mask.reshape(B, L).astype(jnp.float32) - 1.0) * NEG_BIG
    gamma2 = gamma.reshape(1, dim).astype(jnp.float32)
    beta2 = beta.reshape(1, dim).astype(jnp.float32)
    wq_s = (wq * (dim_head ** -0.5)).astype(jnp.bfloat16)           # fold q scale into W_q
    wkv_b = wkv.astype(jnp.bfloat16)
    out_lanes = max(OUT_LANES, ((dim + 127) // 128) * 128)
    wo_pad = jnp.zeros((inner, out_lanes), jnp.float32).at[:, :dim].set(wo)
    wo_pad = wo_pad.astype(jnp.bfloat16)                            # lane-dense output proj

    kernel = functools.partial(_mca_kernel, b_blk=b_blk, t_txt=T,
                               heads=heads, dim_head=dim_head, eps=eps)

    out_pad = pl.pallas_call(
        kernel,
        out_shape=jax.ShapeDtypeStruct((B * T, out_lanes), x.dtype),
        grid_spec=pltpu.PrefetchScalarGridSpec(
            num_scalar_prefetch=0,
            grid=(n_blocks,),
            in_specs=[
                pl.BlockSpec((b_blk * T, dim), lambda i: (i, 0)),          # x rows
                pl.BlockSpec((b_blk, L, dim_audio), lambda i: (i, 0, 0)),  # media (bf16)
                pl.BlockSpec((b_blk, L), lambda i: (i, 0)),                # mask bias
                pl.BlockSpec((1, dim), lambda i: (0, 0)),                  # LN gamma
                pl.BlockSpec((1, dim), lambda i: (0, 0)),                  # LN beta
                pl.BlockSpec((dim, inner), lambda i: (0, 0)),              # W_q (scaled, bf16)
                pl.BlockSpec((dim_audio, 2 * inner), lambda i: (0, 0)),    # W_kv (bf16)
                pl.BlockSpec((inner, out_lanes), lambda i: (0, 0)),        # W_out (padded, bf16)
            ],
            out_specs=pl.BlockSpec((b_blk * T, out_lanes), lambda i: (i, 0)),
        ),
        compiler_params=pltpu.CompilerParams(
            dimension_semantics=("parallel",)),                            # megacore on v7x
    )(x2, media3, bias, gamma2, beta2, wq_s, wkv_b, wo_pad)

    # TODO(synk): for production-scale T/L, add a T tile (and an online-softmax L tile) to
    # the grid and set vmem_limit_bytes explicitly (roughly half the T tile on v7x's 64 MiB).
    return out_pad[:, :dim].reshape(B, T, dim)


def reference_jax(x, media, media_mask, params, *, heads, dim_head, eps=1e-5):
    """Pure-JAX f32 reference mirroring the PyTorch forward (only_attend_immediate_media=False)."""
    gamma, beta, wq, wkv, wo = params
    B, T, dim = x.shape
    L = media.shape[1]
    inner = heads * dim_head
    mu = x.mean(-1, keepdims=True)
    var = ((x - mu) ** 2).mean(-1, keepdims=True)
    xn = (x - mu) / jnp.sqrt(var + eps) * gamma + beta
    q = xn @ wq
    m = media.reshape(B, L, -1)
    kv = m @ wkv
    k, v = kv[..., :inner], kv[..., inner:]
    qh = q.reshape(B, T, heads, dim_head).transpose(0, 2, 1, 3) * dim_head ** (-0.5)
    kh = k.reshape(B, L, heads, dim_head).transpose(0, 2, 1, 3)
    vh = v.reshape(B, L, heads, dim_head).transpose(0, 2, 1, 3)
    sim = jnp.einsum('bhid,bhjd->bhij', qh, kh)
    mask = media_mask.reshape(B, 1, 1, L).astype(bool)
    sim = jnp.where(mask, sim, -jnp.finfo(sim.dtype).max)
    sim = sim - sim.max(-1, keepdims=True)
    attn = jax.nn.softmax(sim, axis=-1)
    out = jnp.einsum('bhij,bhjd->bhid', attn, vh)
    out = out.transpose(0, 2, 1, 3).reshape(B, T, inner)
    return out @ wo


if __name__ == "__main__":
    # Module config (only_attend_immediate_media=False as required by the forward's assert)
    B, T_txt, dim = 2, 8, 32
    dim_audio = 24
    heads, dim_head = 4, 16
    inner_dim = heads * dim_head
    max_window_per_audio = 2
    L = 4                       # L % max_window_per_audio == 0
    assert L % max_window_per_audio == 0

    key = jax.random.PRNGKey(0)
    kx, km, kmask, k1, k2, k3, k4, k5 = jax.random.split(key, 8)

    x = jax.random.normal(kx, (B, T_txt, dim), jnp.float32)
    media = jax.random.normal(km, (B, L, 1, dim_audio), jnp.float32)
    media_mask = jax.random.bernoulli(kmask, 0.7, (B, L, 1))
    media_mask = media_mask.at[:, 0, :].set(True)  # ensure at least one valid media slot

    # Deterministic parameter init (synthetic; matches nn.Module shapes, stored as (in, out))
    gamma = jnp.ones((dim,), jnp.float32)
    beta = jnp.zeros((dim,), jnp.float32)
    wq = 0.05 * jax.random.normal(k1, (dim, inner_dim), jnp.float32)             # to_q (no bias)
    wkv = 0.05 * jax.random.normal(k2, (dim_audio, 2 * inner_dim), jnp.float32)  # to_kv (no bias)
    wo = 0.05 * jax.random.normal(k3, (inner_dim, dim), jnp.float32)             # to_out (no bias)
    params = (gamma, beta, wq, wkv, wo)

    out = masked_cross_attention(x, media, media_mask, params,
                                 heads=heads, dim_head=dim_head)
    out = jax.block_until_ready(out)

    ref = reference_jax(x, media, media_mask, params, heads=heads, dim_head=dim_head)
    # Tolerance loosened vs the f32 reference: the kernel uses bf16 MXU operands
    # (f32 accumulation) and an approx EUP reciprocal, per the perf review.
    np.testing.assert_allclose(np.asarray(out), np.asarray(ref), rtol=3e-2, atol=5e-3)

    print("KERNEL_OK")
</pallas_src>

<mosaic_0001>
module attributes {stable_mosaic.version = 11 : i64} {
  func.func @_mca_kernel(%arg0: i32, %arg1: memref<16x32xf32, #tpu.memory_space<vmem>>, %arg2: memref<2x4x24xbf16, #tpu.memory_space<vmem>>, %arg3: memref<2x4xf32, #tpu.memory_space<vmem>>, %arg4: memref<1x32xf32, #tpu.memory_space<vmem>>, %arg5: memref<1x32xf32, #tpu.memory_space<vmem>>, %arg6: memref<32x64xbf16, #tpu.memory_space<vmem>>, %arg7: memref<24x128xbf16, #tpu.memory_space<vmem>>, %arg8: memref<64x128xbf16, #tpu.memory_space<vmem>>, %arg9: memref<16x128xf32, #tpu.memory_space<vmem>>) attributes {dimension_semantics = [#tpu.dimension_semantics<parallel>], iteration_bounds = array<i64: 1>, scalar_prefetch = 0 : i64, scratch_operands = 0 : i64, tpu.core_type = #tpu.core_type<tc>, window_params = [{transform_indices = @transform_0, window_bounds = array<i64: 16, 32>}, {transform_indices = @transform_1, window_bounds = array<i64: 2, 4, 24>}, {transform_indices = @transform_2, window_bounds = array<i64: 2, 4>}, {pipeline_mode = #tpu.pipeline_mode<synchronous>, transform_indices = @transform_3, window_bounds = array<i64: 1, 32>}, {pipeline_mode = #tpu.pipeline_mode<synchronous>, transform_indices = @transform_4, window_bounds = array<i64: 1, 32>}, {pipeline_mode = #tpu.pipeline_mode<synchronous>, transform_indices = @transform_5, window_bounds = array<i64: 32, 64>}, {pipeline_mode = #tpu.pipeline_mode<synchronous>, transform_indices = @transform_6, window_bounds = array<i64: 24, 128>}, {pipeline_mode = #tpu.pipeline_mode<synchronous>, transform_indices = @transform_7, window_bounds = array<i64: 64, 128>}, {transform_indices = @transform_8, window_bounds = array<i64: 16, 128>}]} {
    %c0 = arith.constant 0 : index
    %c0_0 = arith.constant 0 : index
    %0 = vector.load %arg1[%c0, %c0_0] : memref<16x32xf32, #tpu.memory_space<vmem>>, vector<16x32xf32>
    %cst = arith.constant dense<0.000000e+00> : vector<16xf32>
    %1 = vector.multi_reduction <add>, %0, %cst [1] : vector<16x32xf32> to vector<16xf32>
    %2 = vector.shape_cast %1 : vector<16xf32> to vector<16x1xf32>
    %cst_1 = arith.constant 3.200000e+01 : f32
    %3 = vector.broadcast %cst_1 : f32 to vector<16x1xf32>
    %4 = arith.divf %2, %3 : vector<16x1xf32>
    %5 = vector.broadcast %4 : vector<16x1xf32> to vector<16x32xf32>
    %6 = arith.subf %0, %5 : vector<16x32xf32>
    %7 = arith.mulf %6, %6 : vector<16x32xf32>
    %cst_2 = arith.constant dense<0.000000e+00> : vector<16xf32>
    %8 = vector.multi_reduction <add>, %7, %cst_2 [1] : vector<16x32xf32> to vector<16xf32>
    %9 = vector.shape_cast %8 : vector<16xf32> to vector<16x1xf32>
    %cst_3 = arith.constant 3.200000e+01 : f32
    %10 = vector.broadcast %cst_3 : f32 to vector<16x1xf32>
    %11 = arith.divf %9, %10 : vector<16x1xf32>
    %12 = vector.broadcast %4 : vector<16x1xf32> to vector<16x32xf32>
    %13 = arith.subf %0, %12 : vector<16x32xf32>
    %cst_4 = arith.constant 9.99999974E-6 : f32
    %14 = vector.broadcast %cst_4 : f32 to vector<16x1xf32>
    %15 = arith.addf %11, %14 : vector<16x1xf32>
    %16 = math.rsqrt %15 : vector<16x1xf32>
    %17 = vector.broadcast %16 : vector<16x1xf32> to vector<16x32xf32>
    %18 = arith.mulf %13, %17 : vector<16x32xf32>
    %c0_5 = arith.constant 0 : index
    %c0_6 = arith.constant 0 : index
    %19 = vector.load %arg4[%c0_5, %c0_6] : memref<1x32xf32, #tpu.memory_space<vmem>>, vector<1x32xf32>
    %20 = vector.broadcast %19 : vector<1x32xf32> to vector<16x32xf32>
    %21 = arith.mulf %18, %20 : vector<16x32xf32>
    %c0_7 = arith.constant 0 : index
    %c0_8 = arith.constant 0 : index
    %22 = vector.load %arg5[%c0_7, %c0_8] : memref<1x32xf32, #tpu.memory_space<vmem>>, vector<1x32xf32>
    %23 = vector.broadcast %22 : vector<1x32xf32> to vector<16x32xf32>
    %24 = arith.addf %21, %23 : vector<16x32xf32>
    %25 = arith.truncf %24 : vector<16x32xf32> to vector<16x32xbf16>
    %c0_9 = arith.constant 0 : index
    %c0_10 = arith.constant 0 : index
    %26 = vector.load %arg6[%c0_9, %c0_10] : memref<32x64xbf16, #tpu.memory_space<vmem>>, vector<32x64xbf16>
    %cst_11 = arith.constant dense<0.000000e+00> : vector<16x64xf32>
    %27 = tpu.matmul %25, %26, %cst_11 {dimension_numbers = #tpu.dot_dimension_numbers<[1], [0], [0], [1], [0, 0, 1, 1], [], []>} : vector<16x32xbf16>, vector<32x64xbf16>, vector<16x64xf32> -> vector<16x64xf32>
    %c0_12 = arith.constant 0 : index
    %c0_13 = arith.constant 0 : index
    %28 = vector.load %arg7[%c0_12, %c0_13] : memref<24x128xbf16, #tpu.memory_space<vmem>>, vector<24x128xbf16>
    %c0_14 = arith.constant 0 : index
    %c0_15 = arith.constant 0 : index
    %29 = vector.load %arg8[%c0_14, %c0_15] : memref<64x128xbf16, #tpu.memory_space<vmem>>, vector<64x128xbf16>
    %30 = vector.extract_strided_slice %27 {offsets = [0, 0], sizes = [8, 64], strides = [1, 1]} : vector<16x64xf32> to vector<8x64xf32>
    %c0_16 = arith.constant 0 : index
    %c0_17 = arith.constant 0 : index
    %c0_18 = arith.constant 0 : index
    %31 = vector.load %arg2[%c0_16, %c0_17, %c0_18] : memref<2x4x24xbf16, #tpu.memory_space<vmem>>, vector<1x4x24xbf16>
    %32 = vector.shape_cast %31 : vector<1x4x24xbf16> to vector<4x24xbf16>
    %cst_19 = arith.constant dense<0.000000e+00> : vector<4x128xf32>
    %33 = tpu.matmul %32, %28, %cst_19 {dimension_numbers = #tpu.dot_dimension_numbers<[1], [0], [0], [1], [0, 0, 1, 1], [], []>} : vector<4x24xbf16>, vector<24x128xbf16>, vector<4x128xf32> -> vector<4x128xf32>
    %c0_20 = arith.constant 0 : index
    %c0_21 = arith.constant 0 : index
    %34 = vector.load %arg3[%c0_20, %c0_21] : memref<2x4xf32, #tpu.memory_space<vmem>>, vector<1x4xf32>
    %cst_22 = arith.constant 0.000000e+00 : f32
    %35 = vector.broadcast %cst_22 : f32 to vector<8x128xf32>
    %36 = vector.extract_strided_slice %30 {offsets = [0, 0], sizes = [8, 16], strides = [1, 1]} : vector<8x64xf32> to vector<8x16xf32>
    %37 = arith.truncf %36 : vector<8x16xf32> to vector<8x16xbf16>
    %38 = vector.extract_strided_slice %33 {offsets = [0, 0], sizes = [4, 16], strides = [1, 1]} : vector<4x128xf32> to vector<4x16xf32>
    %39 = arith.truncf %38 : vector<4x16xf32> to vector<4x16xbf16>
    %cst_23 = arith.constant dense<0.000000e+00> : vector<8x4xf32>
    %40 = tpu.matmul %37, %39, %cst_23 {dimension_numbers = #tpu.dot_dimension_numbers<[1], [1], [0], [0], [0, 0, 1, 0], [], []>} : vector<8x16xbf16>, vector<4x16xbf16>, vector<8x4xf32> -> vector<8x4xf32>
    %41 = vector.broadcast %34 : vector<1x4xf32> to vector<8x4xf32>
    %42 = arith.addf %40, %41 : vector<8x4xf32>
    %cst_24 = arith.constant dense<0xFF800000> : vector<8xf32>
    %43 = vector.multi_reduction <maximumf>, %42, %cst_24 [1] : vector<8x4xf32> to vector<8xf32>
    %44 = vector.shape_cast %43 : vector<8xf32> to vector<8x1xf32>
    %45 = vector.broadcast %44 : vector<8x1xf32> to vector<8x4xf32>
    %46 = arith.subf %42, %45 : vector<8x4xf32>
    %47 = math.exp %46 : vector<8x4xf32>
    %cst_25 = arith.constant dense<0.000000e+00> : vector<8xf32>
    %48 = vector.multi_reduction <add>, %47, %cst_25 [1] : vector<8x4xf32> to vector<8xf32>
    %49 = vector.shape_cast %48 : vector<8xf32> to vector<8x1xf32>
    %50 = tpu.reciprocal %49 {approx = true} : vector<8x1xf32> -> vector<8x1xf32>
    %51 = vector.broadcast %50 : vector<8x1xf32> to vector<8x4xf32>
    %52 = arith.mulf %47, %51 : vector<8x4xf32>
    %53 = arith.truncf %52 : vector<8x4xf32> to vector<8x4xbf16>
    %54 = vector.extract_strided_slice %33 {offsets = [0, 64], sizes = [4, 16], strides = [1, 1]} : vector<4x128xf32> to vector<4x16xf32>
    %55 = arith.truncf %54 : vector<4x16xf32> to vector<4x16xbf16>
    %cst_26 = arith.constant dense<0.000000e+00> : vector<8x16xf32>
    %56 = tpu.matmul %53, %55, %cst_26 {dimension_numbers = #tpu.dot_dimension_numbers<[1], [0], [0], [1], [0, 0, 1, 1], [], []>} : vector<8x4xbf16>, vector<4x16xbf16>, vector<8x16xf32> -> vector<8x16xf32>
    %57 = arith.truncf %56 : vector<8x16xf32> to vector<8x16xbf16>
    %58 = vector.extract_strided_slice %29 {offsets = [0, 0], sizes = [16, 128], strides = [1, 1]} : vector<64x128xbf16> to vector<16x128xbf16>
    %cst_27 = arith.constant dense<0.000000e+00> : vector<8x128xf32>
    %59 = tpu.matmul %57, %58, %cst_27 {dimension_numbers = #tpu.dot_dimension_numbers<[1], [0], [0], [1], [0, 0, 1, 1], [], []>} : vector<8x16xbf16>, vector<16x128xbf16>, vector<8x128xf32> -> vector<8x128xf32>
    %60 = arith.addf %35, %59 : vector<8x128xf32>
    %61 = vector.extract_strided_slice %30 {offsets = [0, 16], sizes = [8, 16], strides = [1, 1]} : vector<8x64xf32> to vector<8x16xf32>
    %62 = arith.truncf %61 : vector<8x16xf32> to vector<8x16xbf16>
    %63 = vector.extract_strided_slice %33 {offsets = [0, 16], sizes = [4, 16], strides = [1, 1]} : vector<4x128xf32> to vector<4x16xf32>
    %64 = arith.truncf %63 : vector<4x16xf32> to vector<4x16xbf16>
    %cst_28 = arith.constant dense<0.000000e+00> : vector<8x4xf32>
    %65 = tpu.matmul %62, %64, %cst_28 {dimension_numbers = #tpu.dot_dimension_numbers<[1], [1], [0], [0], [0, 0, 1, 0], [], []>} : vector<8x16xbf16>, vector<4x16xbf16>, vector<8x4xf32> -> vector<8x4xf32>
    %66 = vector.broadcast %34 : vector<1x4xf32> to vector<8x4xf32>
    %67 = arith.addf %65, %66 : vector<8x4xf32>
    %cst_29 = arith.constant dense<0xFF800000> : vector<8xf32>
    %68 = vector.multi_reduction <maximumf>, %67, %cst_29 [1] : vector<8x4xf32> to vector<8xf32>
    %69 = vector.shape_cast %68 : vector<8xf32> to vector<8x1xf32>
    %70 = vector.broadcast %69 : vector<8x1xf32> to vector<8x4xf32>
    %71 = arith.subf %67, %70 : vector<8x4xf32>
    %72 = math.exp %71 : vector<8x4xf32>
    %cst_30 = arith.constant dense<0.000000e+00> : vector<8xf32>
    %73 = vector.multi_reduction <add>, %72, %cst_30 [1] : vector<8x4xf32> to vector<8xf32>
    %74 = vector.shape_cast %73 : vector<8xf32> to vector<8x1xf32>
    %75 = tpu.reciprocal %74 {approx = true} : vector<8x1xf32> -> vector<8x1xf32>
    %76 = vector.broadcast %75 : vector<8x1xf32> to vector<8x4xf32>
    %77 = arith.mulf %72, %76 : vector<8x4xf32>
    %78 = arith.truncf %77 : vector<8x4xf32> to vector<8x4xbf16>
    %79 = vector.extract_strided_slice %33 {offsets = [0, 80], sizes = [4, 16], strides = [1, 1]} : vector<4x128xf32> to vector<4x16xf32>
    %80 = arith.truncf %79 : vector<4x16xf32> to vector<4x16xbf16>
    %cst_31 = arith.constant dense<0.000000e+00> : vector<8x16xf32>
    %81 = tpu.matmul %78, %80, %cst_31 {dimension_numbers = #tpu.dot_dimension_numbers<[1], [0], [0], [1], [0, 0, 1, 1], [], []>} : vector<8x4xbf16>, vector<4x16xbf16>, vector<8x16xf32> -> vector<8x16xf32>
    %82 = arith.truncf %81 : vector<8x16xf32> to vector<8x16xbf16>
    %83 = vector.extract_strided_slice %29 {offsets = [16, 0], sizes = [16, 128], strides = [1, 1]} : vector<64x128xbf16> to vector<16x128xbf16>
    %cst_32 = arith.constant dense<0.000000e+00> : vector<8x128xf32>
    %84 = tpu.matmul %82, %83, %cst_32 {dimension_numbers = #tpu.dot_dimension_numbers<[1], [0], [0], [1], [0, 0, 1, 1], [], []>} : vector<8x16xbf16>, vector<16x128xbf16>, vector<8x128xf32> -> vector<8x128xf32>
    %85 = arith.addf %60, %84 : vector<8x128xf32>
    %86 = vector.extract_strided_slice %30 {offsets = [0, 32], sizes = [8, 16], strides = [1, 1]} : vector<8x64xf32> to vector<8x16xf32>
    %87 = arith.truncf %86 : vector<8x16xf32> to vector<8x16xbf16>
    %88 = vector.extract_strided_slice %33 {offsets = [0, 32], sizes = [4, 16], strides = [1, 1]} : vector<4x128xf32> to vector<4x16xf32>
    %89 = arith.truncf %88 : vector<4x16xf32> to vector<4x16xbf16>
    %cst_33 = arith.constant dense<0.000000e+00> : vector<8x4xf32>
    %90 = tpu.matmul %87, %89, %cst_33 {dimension_numbers = #tpu.dot_dimension_numbers<[1], [1], [0], [0], [0, 0, 1, 0], [], []>} : vector<8x16xbf16>, vector<4x16xbf16>, vector<8x4xf32> -> vector<8x4xf32>
    %91 = vector.broadcast %34 : vector<1x4xf32> to vector<8x4xf32>
    %92 = arith.addf %90, %91 : vector<8x4xf32>
    %cst_34 = arith.constant dense<0xFF800000> : vector<8xf32>
    %93 = vector.multi_reduction <maximumf>, %92, %cst_34 [1] : vector<8x4xf32> to vector<8xf32>
    %94 = vector.shape_cast %93 : vector<8xf32> to vector<8x1xf32>
    %95 = vector.broadcast %94 : vector<8x1xf32> to vector<8x4xf32>
    %96 = arith.subf %92, %95 : vector<8x4xf32>
    %97 = math.exp %96 : vector<8x4xf32>
    %cst_35 = arith.constant dense<0.000000e+00> : vector<8xf32>
    %98 = vector.multi_reduction <add>, %97, %cst_35 [1] : vector<8x4xf32> to vector<8xf32>
    %99 = vector.shape_cast %98 : vector<8xf32> to vector<8x1xf32>
    %100 = tpu.reciprocal %99 {approx = true} : vector<8x1xf32> -> vector<8x1xf32>
    %101 = vector.broadcast %100 : vector<8x1xf32> to vector<8x4xf32>
    %102 = arith.mulf %97, %101 : vector<8x4xf32>
    %103 = arith.truncf %102 : vector<8x4xf32> to vector<8x4xbf16>
    %104 = vector.extract_strided_slice %33 {offsets = [0, 96], sizes = [4, 16], strides = [1, 1]} : vector<4x128xf32> to vector<4x16xf32>
    %105 = arith.truncf %104 : vector<4x16xf32> to vector<4x16xbf16>
    %cst_36 = arith.constant dense<0.000000e+00> : vector<8x16xf32>
    %106 = tpu.matmul %103, %105, %cst_36 {dimension_numbers = #tpu.dot_dimension_numbers<[1], [0], [0], [1], [0, 0, 1, 1], [], []>} : vector<8x4xbf16>, vector<4x16xbf16>, vector<8x16xf32> -> vector<8x16xf32>
    %107 = arith.truncf %106 : vector<8x16xf32> to vector<8x16xbf16>
    %108 = vector.extract_strided_slice %29 {offsets = [32, 0], sizes = [16, 128], strides = [1, 1]} : vector<64x128xbf16> to vector<16x128xbf16>
    %cst_37 = arith.constant dense<0.000000e+00> : vector<8x128xf32>
    %109 = tpu.matmul %107, %108, %cst_37 {dimension_numbers = #tpu.dot_dimension_numbers<[1], [0], [0], [1], [0, 0, 1, 1], [], []>} : vector<8x16xbf16>, vector<16x128xbf16>, vector<8x128xf32> -> vector<8x128xf32>
    %110 = arith.addf %85, %109 : vector<8x128xf32>
    %111 = vector.extract_strided_slice %30 {offsets = [0, 48], sizes = [8, 16], strides = [1, 1]} : vector<8x64xf32> to vector<8x16xf32>
    %112 = arith.truncf %111 : vector<8x16xf32> to vector<8x16xbf16>
    %113 = vector.extract_strided_slice %33 {offsets = [0, 48], sizes = [4, 16], strides = [1, 1]} : vector<4x128xf32> to vector<4x16xf32>
    %114 = arith.truncf %113 : vector<4x16xf32> to vector<4x16xbf16>
    %cst_38 = arith.constant dense<0.000000e+00> : vector<8x4xf32>
    %115 = tpu.matmul %112, %114, %cst_38 {dimension_numbers = #tpu.dot_dimension_numbers<[1], [1], [0], [0], [0, 0, 1, 0], [], []>} : vector<8x16xbf16>, vector<4x16xbf16>, vector<8x4xf32> -> vector<8x4xf32>
    %116 = vector.broadcast %34 : vector<1x4xf32> to vector<8x4xf32>
    %117 = arith.addf %115, %116 : vector<8x4xf32>
    %cst_39 = arith.constant dense<0xFF800000> : vector<8xf32>
    %118 = vector.multi_reduction <maximumf>, %117, %cst_39 [1] : vector<8x4xf32> to vector<8xf32>
    %119 = vector.shape_cast %118 : vector<8xf32> to vector<8x1xf32>
    %120 = vector.broadcast %119 : vector<8x1xf32> to vector<8x4xf32>
    %121 = arith.subf %117, %120 : vector<8x4xf32>
    %122 = math.exp %121 : vector<8x4xf32>
    %cst_40 = arith.constant dense<0.000000e+00> : vector<8xf32>
    %123 = vector.multi_reduction <add>, %122, %cst_40 [1] : vector<8x4xf32> to vector<8xf32>
    %124 = vector.shape_cast %123 : vector<8xf32> to vector<8x1xf32>
    %125 = tpu.reciprocal %124 {approx = true} : vector<8x1xf32> -> vector<8x1xf32>
    %126 = vector.broadcast %125 : vector<8x1xf32> to vector<8x4xf32>
    %127 = arith.mulf %122, %126 : vector<8x4xf32>
    %128 = arith.truncf %127 : vector<8x4xf32> to vector<8x4xbf16>
    %129 = vector.extract_strided_slice %33 {offsets = [0, 112], sizes = [4, 16], strides = [1, 1]} : vector<4x128xf32> to vector<4x16xf32>
    %130 = arith.truncf %129 : vector<4x16xf32> to vector<4x16xbf16>
    %cst_41 = arith.constant dense<0.000000e+00> : vector<8x16xf32>
    %131 = tpu.matmul %128, %130, %cst_41 {dimension_numbers = #tpu.dot_dimension_numbers<[1], [0], [0], [1], [0, 0, 1, 1], [], []>} : vector<8x4xbf16>, vector<4x16xbf16>, vector<8x16xf32> -> vector<8x16xf32>
    %132 = arith.truncf %131 : vector<8x16xf32> to vector<8x16xbf16>
    %133 = vector.extract_strided_slice %29 {offsets = [48, 0], sizes = [16, 128], strides = [1, 1]} : vector<64x128xbf16> to vector<16x128xbf16>
    %cst_42 = arith.constant dense<0.000000e+00> : vector<8x128xf32>
    %134 = tpu.matmul %132, %133, %cst_42 {dimension_numbers = #tpu.dot_dimension_numbers<[1], [0], [0], [1], [0, 0, 1, 1], [], []>} : vector<8x16xbf16>, vector<16x128xbf16>, vector<8x128xf32> -> vector<8x128xf32>
    %135 = arith.addf %110, %134 : vector<8x128xf32>
    %c0_43 = arith.constant 0 : index
    %c0_44 = arith.constant 0 : index
    %136 = vector.load %arg9[%c0_43, %c0_44] : memref<16x128xf32, #tpu.memory_space<vmem>>, vector<8x128xf32>
    tpu.vector_store %arg9[%c0_43, %c0_44], %135 {strides = array<i32>} : memref<16x128xf32, #tpu.memory_space<vmem>>, vector<8x128xf32>,
    %137 = vector.extract_strided_slice %27 {offsets = [8, 0], sizes = [8, 64], strides = [1, 1]} : vector<16x64xf32> to vector<8x64xf32>
    %c1 = arith.constant 1 : index
    %c0_45 = arith.constant 0 : index
    %c0_46 = arith.constant 0 : index
    %138 = vector.load %arg2[%c1, %c0_45, %c0_46] : memref<2x4x24xbf16, #tpu.memory_space<vmem>>, vector<1x4x24xbf16>
    %139 = vector.shape_cast %138 : vector<1x4x24xbf16> to vector<4x24xbf16>
    %cst_47 = arith.constant dense<0.000000e+00> : vector<4x128xf32>
    %140 = tpu.matmul %139, %28, %cst_47 {dimension_numbers = #tpu.dot_dimension_numbers<[1], [0], [0], [1], [0, 0, 1, 1], [], []>} : vector<4x24xbf16>, vector<24x128xbf16>, vector<4x128xf32> -> vector<4x128xf32>
    %c1_48 = arith.constant 1 : index
    %c0_49 = arith.constant 0 : index
    %141 = vector.load %arg3[%c1_48, %c0_49] : memref<2x4xf32, #tpu.memory_space<vmem>>, vector<1x4xf32>
    %cst_50 = arith.constant 0.000000e+00 : f32
    %142 = vector.broadcast %cst_50 : f32 to vector<8x128xf32>
    %143 = vector.extract_strided_slice %137 {offsets = [0, 0], sizes = [8, 16], strides = [1, 1]} : vector<8x64xf32> to vector<8x16xf32>
    %144 = arith.truncf %143 : vector<8x16xf32> to vector<8x16xbf16>
    %145 = vector.extract_strided_slice %140 {offsets = [0, 0], sizes = [4, 16], strides = [1, 1]} : vector<4x128xf32> to vector<4x16xf32>
    %146 = arith.truncf %145 : vector<4x16xf32> to vector<4x16xbf16>
    %cst_51 = arith.constant dense<0.000000e+00> : vector<8x4xf32>
    %147 = tpu.matmul %144, %146, %cst_51 {dimension_numbers = #tpu.dot_dimension_numbers<[1], [1], [0], [0], [0, 0, 1, 0], [], []>} : vector<8x16xbf16>, vector<4x16xbf16>, vector<8x4xf32> -> vector<8x4xf32>
    %148 = vector.broadcast %141 : vector<1x4xf32> to vector<8x4xf32>
    %149 = arith.addf %147, %148 : vector<8x4xf32>
    %cst_52 = arith.constant dense<0xFF800000> : vector<8xf32>
    %150 = vector.multi_reduction <maximumf>, %149, %cst_52 [1] : vector<8x4xf32> to vector<8xf32>
    %151 = vector.shape_cast %150 : vector<8xf32> to vector<8x1xf32>
    %152 = vector.broadcast %151 : vector<8x1xf32> to vector<8x4xf32>
    %153 = arith.subf %149, %152 : vector<8x4xf32>
    %154 = math.exp %153 : vector<8x4xf32>
    %cst_53 = arith.constant dense<0.000000e+00> : vector<8xf32>
    %155 = vector.multi_reduction <add>, %154, %cst_53 [1] : vector<8x4xf32> to vector<8xf32>
    %156 = vector.shape_cast %155 : vector<8xf32> to vector<8x1xf32>
    %157 = tpu.reciprocal %156 {approx = true} : vector<8x1xf32> -> vector<8x1xf32>
    %158 = vector.broadcast %157 : vector<8x1xf32> to vector<8x4xf32>
    %159 = arith.mulf %154, %158 : vector<8x4xf32>
    %160 = arith.truncf %159 : vector<8x4xf32> to vector<8x4xbf16>
    %161 = vector.extract_strided_slice %140 {offsets = [0, 64], sizes = [4, 16], strides = [1, 1]} : vector<4x128xf32> to vector<4x16xf32>
    %162 = arith.truncf %161 : vector<4x16xf32> to vector<4x16xbf16>
    %cst_54 = arith.constant dense<0.000000e+00> : vector<8x16xf32>
    %163 = tpu.matmul %160, %162, %cst_54 {dimension_numbers = #tpu.dot_dimension_numbers<[1], [0], [0], [1], [0, 0, 1, 1], [], []>} : vector<8x4xbf16>, vector<4x16xbf16>, vector<8x16xf32> -> vector<8x16xf32>
    %164 = arith.truncf %163 : vector<8x16xf32> to vector<8x16xbf16>
    %165 = vector.extract_strided_slice %29 {offsets = [0, 0], sizes = [16, 128], strides = [1, 1]} : vector<64x128xbf16> to vector<16x128xbf16>
    %cst_55 = arith.constant dense<0.000000e+00> : vector<8x128xf32>
    %166 = tpu.matmul %164, %165, %cst_55 {dimension_numbers = #tpu.dot_dimension_numbers<[1], [0], [0], [1], [0, 0, 1, 1], [], []>} : vector<8x16xbf16>, vector<16x128xbf16>, vector<8x128xf32> -> vector<8x128xf32>
    %167 = arith.addf %142, %166 : vector<8x128xf32>
    %168 = vector.extract_strided_slice %137 {offsets = [0, 16], sizes = [8, 16], strides = [1, 1]} : vector<8x64xf32> to vector<8x16xf32>
    %169 = arith.truncf %168 : vector<8x16xf32> to vector<8x16xbf16>
    %170 = vector.extract_strided_slice %140 {offsets = [0, 16], sizes = [4, 16], strides = [1, 1]} : vector<4x128xf32> to vector<4x16xf32>
    %171 = arith.truncf %170 : vector<4x16xf32> to vector<4x16xbf16>
    %cst_56 = arith.constant dense<0.000000e+00> : vector<8x4xf32>
    %172 = tpu.matmul %169, %171, %cst_56 {dimension_numbers = #tpu.dot_dimension_numbers<[1], [1], [0], [0], [0, 0, 1, 0], [], []>} : vector<8x16xbf16>, vector<4x16xbf16>, vector<8x4xf32> -> vector<8x4xf32>
    %173 = vector.broadcast %141 : vector<1x4xf32> to vector<8x4xf32>
    %174 = arith.addf %172, %173 : vector<8x4xf32>
    %cst_57 = arith.constant dense<0xFF800000> : vector<8xf32>
    %175 = vector.multi_reduction <maximumf>, %174, %cst_57 [1] : vector<8x4xf32> to vector<8xf32>
    %176 = vector.shape_cast %175 : vector<8xf32> to vector<8x1xf32>
    %177 = vector.broadcast %176 : vector<8x1xf32> to vector<8x4xf32>
    %178 = arith.subf %174, %177 : vector<8x4xf32>
    %179 = math.exp %178 : vector<8x4xf32>
    %cst_58 = arith.constant dense<0.000000e+00> : vector<8xf32>
    %180 = vector.multi_reduction <add>, %179, %cst_58 [1] : vector<8x4xf32> to vector<8xf32>
    %181 = vector.shape_cast %180 : vector<8xf32> to vector<8x1xf32>
    %182 = tpu.reciprocal %181 {approx = true} : vector<8x1xf32> -> vector<8x1xf32>
    %183 = vector.broadcast %182 : vector<8x1xf32> to vector<8x4xf32>
    %184 = arith.mulf %179, %183 : vector<8x4xf32>
    %185 = arith.truncf %184 : vector<8x4xf32> to vector<8x4xbf16>
    %186 = vector.extract_strided_slice %140 {offsets = [0, 80], sizes = [4, 16], strides = [1, 1]} : vector<4x128xf32> to vector<4x16xf32>
    %187 = arith.truncf %186 : vector<4x16xf32> to vector<4x16xbf16>
    %cst_59 = arith.constant dense<0.000000e+00> : vector<8x16xf32>
    %188 = tpu.matmul %185, %187, %cst_59 {dimension_numbers = #tpu.dot_dimension_numbers<[1], [0], [0], [1], [0, 0, 1, 1], [], []>} : vector<8x4xbf16>, vector<4x16xbf16>, vector<8x16xf32> -> vector<8x16xf32>
    %189 = arith.truncf %188 : vector<8x16xf32> to vector<8x16xbf16>
    %190 = vector.extract_strided_slice %29 {offsets = [16, 0], sizes = [16, 128], strides = [1, 1]} : vector<64x128xbf16> to vector<16x128xbf16>
    %cst_60 = arith.constant dense<0.000000e+00> : vector<8x128xf32>
    %191 = tpu.matmul %189, %190, %cst_60 {dimension_numbers = #tpu.dot_dimension_numbers<[1], [0], [0], [1], [0, 0, 1, 1], [], []>} : vector<8x16xbf16>, vector<16x128xbf16>, vector<8x128xf32> -> vector<8x128xf32>
    %192 = arith.addf %167, %191 : vector<8x128xf32>
    %193 = vector.extract_strided_slice %137 {offsets = [0, 32], sizes = [8, 16], strides = [1, 1]} : vector<8x64xf32> to vector<8x16xf32>
    %194 = arith.truncf %193 : vector<8x16xf32> to vector<8x16xbf16>
    %195 = vector.extract_strided_slice %140 {offsets = [0, 32], sizes = [4, 16], strides = [1, 1]} : vector<4x128xf32> to vector<4x16xf32>
    %196 = arith.truncf %195 : vector<4x16xf32> to vector<4x16xbf16>
    %cst_61 = arith.constant dense<0.000000e+00> : vector<8x4xf32>
    %197 = tpu.matmul %194, %196, %cst_61 {dimension_numbers = #tpu.dot_dimension_numbers<[1], [1], [0], [0], [0, 0, 1, 0], [], []>} : vector<8x16xbf16>, vector<4x16xbf16>, vector<8x4xf32> -> vector<8x4xf32>
    %198 = vector.broadcast %141 : vector<1x4xf32> to vector<8x4xf32>
    %199 = arith.addf %197, %198 : vector<8x4xf32>
    %cst_62 = arith.constant dense<0xFF800000> : vector<8xf32>
    %200 = vector.multi_reduction <maximumf>, %199, %cst_62 [1] : vector<8x4xf32> to vector<8xf32>
    %201 = vector.shape_cast %200 : vector<8xf32> to vector<8x1xf32>
    %202 = vector.broadcast %201 : vector<8x1xf32> to vector<8x4xf32>
    %203 = arith.subf %199, %202 : vector<8x4xf32>
    %204 = math.exp %203 : vector<8x4xf32>
    %cst_63 = arith.constant dense<0.000000e+00> : vector<8xf32>
    %205 = vector.multi_reduction <add>, %204, %cst_63 [1] : vector<8x4xf32> to vector<8xf32>
    %206 = vector.shape_cast %205 : vector<8xf32> to vector<8x1xf32>
    %207 = tpu.reciprocal %206 {approx = true} : vector<8x1xf32> -> vector<8x1xf32>
    %208 = vector.broadcast %207 : vector<8x1xf32> to vector<8x4xf32>
    %209 = arith.mulf %204, %208 : vector<8x4xf32>
    %210 = arith.truncf %209 : vector<8x4xf32> to vector<8x4xbf16>
    %211 = vector.extract_strided_slice %140 {offsets = [0, 96], sizes = [4, 16], strides = [1, 1]} : vector<4x128xf32> to vector<4x16xf32>
    %212 = arith.truncf %211 : vector<4x16xf32> to vector<4x16xbf16>
    %cst_64 = arith.constant dense<0.000000e+00> : vector<8x16xf32>
    %213 = tpu.matmul %210, %212, %cst_64 {dimension_numbers = #tpu.dot_dimension_numbers<[1], [0], [0], [1], [0, 0, 1, 1], [], []>} : vector<8x4xbf16>, vector<4x16xbf16>, vector<8x16xf32> -> vector<8x16xf32>
    %214 = arith.truncf %213 : vector<8x16xf32> to vector<8x16xbf16>
    %215 = vector.extract_strided_slice %29 {offsets = [32, 0], sizes = [16, 128], strides = [1, 1]} : vector<64x128xbf16> to vector<16x128xbf16>
    %cst_65 = arith.constant dense<0.000000e+00> : vector<8x128xf32>
    %216 = tpu.matmul %214, %215, %cst_65 {dimension_numbers = #tpu.dot_dimension_numbers<[1], [0], [0], [1], [0, 0, 1, 1], [], []>} : vector<8x16xbf16>, vector<16x128xbf16>, vector<8x128xf32> -> vector<8x128xf32>
    %217 = arith.addf %192, %216 : vector<8x128xf32>
    %218 = vector.extract_strided_slice %137 {offsets = [0, 48], sizes = [8, 16], strides = [1, 1]} : vector<8x64xf32> to vector<8x16xf32>
    %219 = arith.truncf %218 : vector<8x16xf32> to vector<8x16xbf16>
    %220 = vector.extract_strided_slice %140 {offsets = [0, 48], sizes = [4, 16], strides = [1, 1]} : vector<4x128xf32> to vector<4x16xf32>
    %221 = arith.truncf %220 : vector<4x16xf32> to vector<4x16xbf16>
    %cst_66 = arith.constant dense<0.000000e+00> : vector<8x4xf32>
    %222 = tpu.matmul %219, %221, %cst_66 {dimension_numbers = #tpu.dot_dimension_numbers<[1], [1], [0], [0], [0, 0, 1, 0], [], []>} : vector<8x16xbf16>, vector<4x16xbf16>, vector<8x4xf32> -> vector<8x4xf32>
    %223 = vector.broadcast %141 : vector<1x4xf32> to vector<8x4xf32>
    %224 = arith.addf %222, %223 : vector<8x4xf32>
    %cst_67 = arith.constant dense<0xFF800000> : vector<8xf32>
    %225 = vector.multi_reduction <maximumf>, %224, %cst_67 [1] : vector<8x4xf32> to vector<8xf32>
    %226 = vector.shape_cast %225 : vector<8xf32> to vector<8x1xf32>
    %227 = vector.broadcast %226 : vector<8x1xf32> to vector<8x4xf32>
    %228 = arith.subf %224, %227 : vector<8x4xf32>
    %229 = math.exp %228 : vector<8x4xf32>
    %cst_68 = arith.constant dense<0.000000e+00> : vector<8xf32>
    %230 = vector.multi_reduction <add>, %229, %cst_68 [1] : vector<8x4xf32> to vector<8xf32>
    %231 = vector.shape_cast %230 : vector<8xf32> to vector<8x1xf32>
    %232 = tpu.reciprocal %231 {approx = true} : vector<8x1xf32> -> vector<8x1xf32>
    %233 = vector.broadcast %232 : vector<8x1xf32> to vector<8x4xf32>
    %234 = arith.mulf %229, %233 : vector<8x4xf32>
    %235 = arith.truncf %234 : vector<8x4xf32> to vector<8x4xbf16>
    %236 = vector.extract_strided_slice %140 {offsets = [0, 112], sizes = [4, 16], strides = [1, 1]} : vector<4x128xf32> to vector<4x16xf32>
    %237 = arith.truncf %236 : vector<4x16xf32> to vector<4x16xbf16>
    %cst_69 = arith.constant dense<0.000000e+00> : vector<8x16xf32>
    %238 = tpu.matmul %235, %237, %cst_69 {dimension_numbers = #tpu.dot_dimension_numbers<[1], [0], [0], [1], [0, 0, 1, 1], [], []>} : vector<8x4xbf16>, vector<4x16xbf16>, vector<8x16xf32> -> vector<8x16xf32>
    %239 = arith.truncf %238 : vector<8x16xf32> to vector<8x16xbf16>
    %240 = vector.extract_strided_slice %29 {offsets = [48, 0], sizes = [16, 128], strides = [1, 1]} : vector<64x128xbf16> to vector<16x128xbf16>
    %cst_70 = arith.constant dense<0.000000e+00> : vector<8x128xf32>
    %241 = tpu.matmul %239, %240, %cst_70 {dimension_numbers = #tpu.dot_dimension_numbers<[1], [0], [0], [1], [0, 0, 1, 1], [], []>} : vector<8x16xbf16>, vector<16x128xbf16>, vector<8x128xf32> -> vector<8x128xf32>
    %242 = arith.addf %217, %241 : vector<8x128xf32>
    %c8 = arith.constant 8 : index
    %c0_71 = arith.constant 0 : index
    %243 = vector.load %arg9[%c8, %c0_71] : memref<16x128xf32, #tpu.memory_space<vmem>>, vector<8x128xf32>
    tpu.vector_store %arg9[%c8, %c0_71], %242 {strides = array<i32>} : memref<16x128xf32, #tpu.memory_space<vmem>>, vector<8x128xf32>,
    return
  }
  func.func @transform_0(%arg0: i32) -> (i32, i32) {
    %c0_i32 = arith.constant 0 : i32
    %c0_i32_0 = arith.constant 0 : i32
    return %arg0, %c0_i32 : i32, i32
  }
  func.func @transform_1(%arg0: i32) -> (i32, i32, i32) {
    %c0_i32 = arith.constant 0 : i32
    %c0_i32_0 = arith.constant 0 : i32
    %c0_i32_1 = arith.constant 0 : i32
    return %arg0, %c0_i32, %c0_i32_0 : i32, i32, i32
  }
  func.func @transform_2(%arg0: i32) -> (i32, i32) {
    %c0_i32 = arith.constant 0 : i32
    %c0_i32_0 = arith.constant 0 : i32
    return %arg0, %c0_i32 : i32, i32
  }
  func.func @transform_3(%arg0: i32) -> (i32, i32) {
    %c0_i32 = arith.constant 0 : i32
    %c0_i32_0 = arith.constant 0 : i32
    %c0_i32_1 = arith.constant 0 : i32
    return %c0_i32, %c0_i32_0 : i32, i32
  }
  func.func @transform_4(%arg0: i32) -> (i32, i32) {
    %c0_i32 = arith.constant 0 : i32
    %c0_i32_0 = arith.constant 0 : i32
    %c0_i32_1 = arith.constant 0 : i32
    return %c0_i32, %c0_i32_0 : i32, i32
  }
  func.func @transform_5(%arg0: i32) -> (i32, i32) {
    %c0_i32 = arith.constant 0 : i32
    %c0_i32_0 = arith.constant 0 : i32
    %c0_i32_1 = arith.constant 0 : i32
    return %c0_i32, %c0_i32_0 : i32, i32
  }
  func.func @transform_6(%arg0: i32) -> (i32, i32) {
    %c0_i32 = arith.constant 0 : i32
    %c0_i32_0 = arith.constant 0 : i32
    %c0_i32_1 = arith.constant 0 : i32
    return %c0_i32, %c0_i32_0 : i32, i32
  }
  func.func @transform_7(%arg0: i32) -> (i32, i32) {
    %c0_i32 = arith.constant 0 : i32
    %c0_i32_0 = arith.constant 0 : i32
    %c0_i32_1 = arith.constant 0 : i32
    return %c0_i32, %c0_i32_0 : i32, i32
  }
  func.func @transform_8(%arg0: i32) -> (i32, i32) {
    %c0_i32 = arith.constant 0 : i32
    %c0_i32_0 = arith.constant 0 : i32
    return %arg0, %c0_i32 : i32, i32
  }
}

</mosaic_0001>

<llo_original>
// kernel: tpu_custom_call.1
$region0: #{tpu_custom_call.1}
  #allocation0 [shape = 'u32[]', space=smem, size = 0x4, offset = 0x4, fixed_abs, tag = 'smem constant byte address 0x4 - core index']
  #allocation1 [shape = 'u32[144,128]{1,0:T(1,128)}', space=vmem, size = 0x12000, scoped, tag = 'internal scratch']
  %s0 = inlined_call_operand.hbm [shape: f32[16,32], index: 0, kind: input, shape index: {}]
  %s1 = inlined_call_operand.hbm [shape: bf16[2,4,24], index: 1, kind: input, shape index: {}]
  %s2 = inlined_call_operand.vmem [shape: f32[2,4], index: 2, kind: input, shape index: {}]
  %s3 = inlined_call_operand.hbm [shape: f32[1,32], index: 3, kind: input, shape index: {}]
  %s4 = inlined_call_operand.hbm [shape: f32[1,32], index: 4, kind: input, shape index: {}]
  %s5 = inlined_call_operand.vmem [shape: bf16[32,64], index: 5, kind: input, shape index: {}]
  %s6 = inlined_call_operand.hbm [shape: bf16[24,128], index: 6, kind: input, shape index: {}]
  %s7 = inlined_call_operand.hbm [shape: bf16[64,128], index: 7, kind: input, shape index: {}]
  %s8 = inlined_call_operand.hbm [shape: f32[16,128], index: 8, kind: output, shape index: {}]
  %s9 = sld [smem:[#allocation0]]
  $region66: #{tpu_custom_call.1} parent=0
    _
  %s11 = ssub.s32 1, %s9
  %s12 = scalar_select 0, %s11, %s9
  $region1: #{tpu_custom_call.1} parent=0
    #allocation2 [shape = 'u8[8192]{0}', space=vmem, size = 0x2000, scoped, tag = 'input window, operand 0, single buffered']
    #allocation3 [shape = 's32[1]{0}', space=sflag, size = 0x4, scoped, tag = 'scoped memory for tpu_custom_call.1']
    #allocation4 [shape = 's32[1]{0}', space=sflag, size = 0x4, scoped, tag = 'scoped memory for tpu_custom_call.1']
    #allocation5 [shape = 'u8[2048]{0}', space=vmem, size = 0x800, scoped, tag = 'input window, operand 1, single buffered']
    #allocation6 [shape = 's32[1]{0}', space=sflag, size = 0x4, scoped, tag = 'scoped memory for tpu_custom_call.1']
    #allocation7 [shape = 'u8[512]{0}', space=vmem, size = 0x400, scoped, tag = 'input window, operand 3, single buffered']
    #allocation8 [shape = 'u8[512]{0}', space=vmem, size = 0x400, scoped, tag = 'input window, operand 4, single buffered']
    #allocation9 [shape = 's32[1]{0}', space=sflag, size = 0x4, scoped, tag = 'scoped memory for tpu_custom_call.1']
    #allocation10 [shape = 'u8[6144]{0}', space=vmem, size = 0x1800, scoped, tag = 'input window, operand 6, single buffered']
    #allocation11 [shape = 'u8[16384]{0}', space=vmem, size = 0x4000, scoped, tag = 'input window, operand 7, single buffered']
    #allocation12 [shape = 's32[1]{0}', space=sflag, size = 0x4, scoped, tag = 'scoped memory for tpu_custom_call.1']
    #allocation13 [shape = 'u8[8192]{0}', space=vmem, size = 0x2000, scoped, tag = 'output window, operand 0, single buffered']
    %13 = vsyncpa [#allocation3], 0
    %14 = vsyncpa [#allocation6], 0
    %15 = vsyncpa [#allocation9], 0
    %16 = vsyncpa [#allocation12], 0
    %17 = vsyncpa [#allocation4], 0
    // Predicated region
    $region2: #{tpu_custom_call.1} parent=1 // pred_check
      _
    $region3: #{tpu_custom_call.1} parent=1 // pred_check_branch
      %19 = sbr.rel (0) target = $region5
    $region4: #{tpu_custom_call.1} parent=1 // pred_region
      %s21 = ssub.s32 256, 256
      %22 = vsyncadd [#allocation3], %s21
      %s23 = sshll.u32 [#allocation2], 4
      %s24 = int_to_ptr.vmem [resolvable:$true] %s23
      %29 = dma.hbm_to_vmem [thread:$0]  %s0, 256, %s24, [#allocation3], 128, 128, 8
    $region5: #{tpu_custom_call.1} parent=1 // pred_fallthru
      _
    // Predicated region
    $region6: #{tpu_custom_call.1} parent=1 // pred_check
      _
    $region7: #{tpu_custom_call.1} parent=1 // pred_check_branch
      %31 = sbr.rel (0) target = $region9
    $region8: #{tpu_custom_call.1} parent=1 // pred_region
      %s33 = ssub.s32 64, 64
      %34 = vsyncadd [#allocation6], %s33
      %s35 = sshll.u32 [#allocation5], 4
      %s36 = int_to_ptr.vmem [resolvable:$true] %s35
      %41 = dma.hbm_to_vmem [thread:$0]  %s1, 64, %s36, [#allocation6], 32, 32, 2
    $region9: #{tpu_custom_call.1} parent=1 // pred_fallthru
      _
    // Predicated region
    $region10: #{tpu_custom_call.1} parent=1 // pred_check
      _
    $region11: #{tpu_custom_call.1} parent=1 // pred_check_branch
      %43 = sbr.rel (0) target = $region13
    $region12: #{tpu_custom_call.1} parent=1 // pred_region
      _
    $region13: #{tpu_custom_call.1} parent=1 // pred_fallthru
      _
    // Predicated region
    $region14: #{tpu_custom_call.1} parent=1 // pred_check
      _
    $region15: #{tpu_custom_call.1} parent=1 // pred_check_branch
      %45 = sbr.rel (0) target = $region17
    $region16: #{tpu_custom_call.1} parent=1 // pred_region
      %s47 = ssub.s32 16, 16
      %48 = vsyncadd [#allocation6], %s47
      %s50 = sshll.u32 [#allocation7], 4
      %s51 = int_to_ptr.vmem [resolvable:$true] %s50
      %53 = dma.hbm_to_vmem [thread:$0]  %s3, 16, %s51, [#allocation6]
    $region17: #{tpu_custom_call.1} parent=1 // pred_fallthru
      _
    // Predicated region
    $region18: #{tpu_custom_call.1} parent=1 // pred_check
      _
    $region19: #{tpu_custom_call.1} parent=1 // pred_check_branch
      %55 = sbr.rel (0) target = $region21
    $region20: #{tpu_custom_call.1} parent=1 // pred_region
      %s57 = ssub.s32 16, 16
      %58 = vsyncadd [#allocation9], %s57
      %s60 = sshll.u32 [#allocation8], 4
      %s61 = int_to_ptr.vmem [resolvable:$true] %s60
      %63 = dma.hbm_to_vmem [thread:$0]  %s4, 16, %s61, [#allocation9]
    $region21: #{tpu_custom_call.1} parent=1 // pred_fallthru
      _
    // Predicated region
    $region22: #{tpu_custom_call.1} parent=1 // pred_check
      _
    $region23: #{tpu_custom_call.1} parent=1 // pred_check_branch
      %65 = sbr.rel (0) target = $region25
    $region24: #{tpu_custom_call.1} parent=1 // pred_region
      _
    $region25: #{tpu_custom_call.1} parent=1 // pred_fallthru
      _
    // Predicated region
    $region26: #{tpu_custom_call.1} parent=1 // pred_check
      _
    $region27: #{tpu_custom_call.1} parent=1 // pred_check_branch
      %67 = sbr.rel (0) target = $region29
    $region28: #{tpu_custom_call.1} parent=1 // pred_region
      %s69 = ssub.s32 192, 192
      %70 = vsyncadd [#allocation9], %s69
      %s71 = sshll.u32 [#allocation10], 4
      %s72 = int_to_ptr.vmem [resolvable:$true] %s71
      %77 = dma.hbm_to_vmem [thread:$0]  %s6, 192, %s72, [#allocation9], 64, 64, 4
    $region29: #{tpu_custom_call.1} parent=1 // pred_fallthru
      _
    // Predicated region
    $region30: #{tpu_custom_call.1} parent=1 // pred_check
      _
    $region31: #{tpu_custom_call.1} parent=1 // pred_check_branch
      %79 = sbr.rel (0) target = $region33
    $region32: #{tpu_custom_call.1} parent=1 // pred_region
      %s81 = ssub.s32 512, 512
      %82 = vsyncadd [#allocation12], %s81
      %s83 = sshll.u32 [#allocation11], 4
      %s84 = int_to_ptr.vmem [resolvable:$true] %s83
      %89 = dma.hbm_to_vmem [thread:$0]  %s7, 512, %s84, [#allocation12], 64, 64, 4
    $region33: #{tpu_custom_call.1} parent=1 // pred_fallthru
      _
    // Predicated region
    $region34: #{tpu_custom_call.1} parent=1 // pred_check
      _
    $region35: #{tpu_custom_call.1} parent=1 // pred_check_branch
      %91 = sbr.rel (0) target = $region37
    $region36: #{tpu_custom_call.1} parent=1 // pred_region
      %92 = dma.done [#allocation3], 256
    $region37: #{tpu_custom_call.1} parent=1 // pred_fallthru
      _
    // Predicated region
    $region38: #{tpu_custom_call.1} parent=1 // pred_check
      _
    $region39: #{tpu_custom_call.1} parent=1 // pred_check_branch
      %94 = sbr.rel (0) target = $region41
    $region40: #{tpu_custom_call.1} parent=1 // pred_region
      %95 = dma.done [#allocation6], 64
    $region41: #{tpu_custom_call.1} parent=1 // pred_fallthru
      _
    // Predicated region
    $region42: #{tpu_custom_call.1} parent=1 // pred_check
      _
    $region43: #{tpu_custom_call.1} parent=1 // pred_check_branch
      %97 = sbr.rel (0) target = $region45
    $region44: #{tpu_custom_call.1} parent=1 // pred_region
      %98 = dma.done [#allocation6], 16
    $region45: #{tpu_custom_call.1} parent=1 // pred_fallthru
      _
    // Predicated region
    $region46: #{tpu_custom_call.1} parent=1 // pred_check
      _
    $region47: #{tpu_custom_call.1} parent=1 // pred_check_branch
      %100 = sbr.rel (0) target = $region49
    $region48: #{tpu_custom_call.1} parent=1 // pred_region
      %101 = dma.done [#allocation9], 16
    $region49: #{tpu_custom_call.1} parent=1 // pred_fallthru
      _
    // Predicated region
    $region50: #{tpu_custom_call.1} parent=1 // pred_check
      _
    $region51: #{tpu_custom_call.1} parent=1 // pred_check_branch
      %103 = sbr.rel (0) target = $region53
    $region52: #{tpu_custom_call.1} parent=1 // pred_region
      %104 = dma.done [#allocation9], 192
    $region53: #{tpu_custom_call.1} parent=1 // pred_fallthru
      _
    // Predicated region
    $region54: #{tpu_custom_call.1} parent=1 // pred_check
      _
    $region55: #{tpu_custom_call.1} parent=1 // pred_check_branch
      %106 = sbr.rel (0) target = $region57
    $region56: #{tpu_custom_call.1} parent=1 // pred_region
      %107 = dma.done [#allocation12], 512
    $region57: #{tpu_custom_call.1} parent=1 // pred_fallthru
      _
    %v109 = vld [vmem:[#allocation2] sm:$0xff]
    %v110 = vld [vmem:[#allocation2 + $0x8] sm:$0xff]
    %vm111 = vcmask 261120
    %v112 = vsel %vm111, %v109, 0.0
    %113 = vadd.xlane.f32.xlu0 %v112
    %v114 = vpop.xlane.xlu0 %113
    %v115 = vsel %vm111, %v110, 0.0
    %116 = vadd.xlane.f32.xlu0 %v115
    %v117 = vpop.xlane.xlu0 %116
    %v118 = vrcp.pop 32.0
    %v119 = vmul.f32 %v114, %v118
    %v120 = vmul.f32 %v117, %v118
    %v121 = vsub.f32 %v109, %v119
    %v122 = vsub.f32 %v110, %v120
    %v123 = vmul.f32 %v121, %v121
    %v124 = vmul.f32 %v122, %v122
    %v125 = vsel %vm111, %v123, 0.0
    %126 = vadd.xlane.f32.xlu0 %v125
    %v127 = vpop.xlane.xlu0 %126
    %v128 = vsel %vm111, %v124, 0.0
    %129 = vadd.xlane.f32.xlu0 %v128
    %v130 = vpop.xlane.xlu0 %129
    %v131 = vmul.f32 %v127, %v118
    %v132 = vmul.f32 %v130, %v118
    %v133 = vadd.f32 %v131, 1e-05
    %v134 = vadd.f32 %v132, 1e-05
    %v135 = vrsqrt.pop %v133
    %v136 = vrsqrt.pop %v134
    %v137 = vmul.f32 %v121, %v135
    %v138 = vmul.f32 %v122, %v136
    %v139 = vld [vmem:[#allocation7] sm:$0x1]
    %v141 = vlaneseq
    %v142 = vshrl.u32 %v141, 7
    %v143 = vsub.s32 0, %v142
    %v144 = vrot.slane %v139, %v143
    %v146 = vmul.f32 %v137, %v144
    %v147 = vmul.f32 %v138, %v144
    %v148 = vld [vmem:[#allocation8] sm:$0x1]
    %v150 = vlaneseq
    %v151 = vshrl.u32 %v150, 7
    %v152 = vsub.s32 0, %v151
    %v153 = vrot.slane %v148, %v152
    %v155 = vadd.f32 %v146, %v153
    %v156 = vadd.f32 %v147, %v153
    %v157 = vpack.c.bf16 %v156, %v155
    %v158 = vld [vmem:[%s5] sm:$0xf]
    %v159 = vld [vmem:[%s5 + $0x4] sm:$0xf]
    %v160 = vld [vmem:[%s5 + $0x8] sm:$0xf]
    %v161 = vld [vmem:[%s5 + $0xc] sm:$0xf]
    %v166 = vunpack.c.l.b16 %v158
    %v167 = vunpack.c.l.b16 %v159
    %v168 = vunpack.c.l.b16 %v160
    %v169 = vunpack.c.l.b16 %v161
    %v170 = vpack.c.b16 %v167, %v166
    %v171 = vpack.c.b16 %v169, %v168
    %v175 = vsel %vm111, %v157, 0
    %177 = vmatprep.subr.bf16.mxu0 0
    %178 = vmatpush1.bf16.msra.mxu0 %v170
    %179 = vmatprep.subr.bf16.mxu0 0
    %180 = vmatpush1.bf16.msra.mxu0 %v171
    %181 = vmatprep.subr.bf16.mxu0 0
    %182 = vmatpush1.bf16.msra.mxu0 0
    %183 = vmatprep.subr.bf16.mxu0 0
    %184 = vmatpush1.bf16.msra.mxu0 0
    %185 = vmatprep.subr.bf16.mxu0 0
    %186 = vmatpush1.bf16.msra.mxu0 0
    %187 = vmatprep.subr.bf16.mxu0 0
    %188 = vmatpush1.bf16.msra.mxu0 0
    %189 = vmatprep.subr.bf16.mxu0 0
    %190 = vmatpush1.bf16.msra.mxu0 0
    %191 = vmatprep.subr.bf16.mxu0 0
    %192 = vmatpush1.bf16.msra.mxu0 0
    %193 = vmatprep.subr.bf16.mxu0 0
    %194 = vmatpush1.bf16.msra.mxu0 0
    %195 = vmatprep.subr.bf16.mxu0 0
    %196 = vmatpush1.bf16.msra.mxu0 0
    %197 = vmatprep.subr.bf16.mxu0 0
    %198 = vmatpush1.bf16.msra.mxu0 0
    %199 = vmatprep.subr.bf16.mxu0 0
    %200 = vmatpush1.bf16.msra.mxu0 0
    %201 = vmatprep.subr.bf16.mxu0 0
    %202 = vmatpush1.bf16.msra.mxu0 0
    %203 = vmatprep.subr.bf16.mxu0 0
    %204 = vmatpush1.bf16.msra.mxu0 0
    %205 = vmatprep.subr.bf16.mxu0 0
    %206 = vmatpush1.bf16.msra.mxu0 0
    %207 = vmatprep.subr.bf16.mxu0 0
    %208 = vmatpush1.bf16.msra.mxu0 0
    %209 = vmatprep.mubr.bf16.mxu0 0
    %210 = vmatmul.mubr.bf16.gmra.mrb[0].mxu0 %v175
    %v211 = vpop.f32.mrb[0].mxu0
    %v212 = vadd.f32 0.0, %v211
    %v213 = vpop.f32.mrb[0].mxu0
    %v214 = vpop.f32.mrb[0].mxu0
    %v215 = vadd.f32 0.0, %v214
    %v216 = vpop.f32.mrb[0].mxu0
    %217 = vdwg.mxu0
    %v218 = vld [vmem:[#allocation10] sm:$0xf]
    %v219 = vld [vmem:[#allocation10 + $0x4] sm:$0xf]
    %v220 = vld [vmem:[#allocation10 + $0x8] sm:$0xf]
    %v221 = vld [vmem:[#allocation11] sm:$0xf]
    %v222 = vld [vmem:[#allocation11 + $0x4] sm:$0xf]
    %v223 = vld [vmem:[#allocation11 + $0x8] sm:$0xf]
    %v224 = vld [vmem:[#allocation11 + $0xc] sm:$0xf]
    %v225 = vld [vmem:[#allocation11 + $0x10] sm:$0xf]
    %v226 = vld [vmem:[#allocation11 + $0x14] sm:$0xf]
    %v227 = vld [vmem:[#allocation11 + $0x18] sm:$0xf]
    %v228 = vld [vmem:[#allocation11 + $0x1c] sm:$0xf]
    %v229 = vld [vmem:[#allocation5] sm:$0x3]
    %v233 = vunpack.c.l.b16 %v218
    %v234 = vunpack.c.l.b16 %v219
    %v235 = vunpack.c.l.b16 %v220
    %v236 = vpack.c.b16 %v234, %v233
    %v237 = vpack.c.b16 %v235, %v235
    %vm239 = vcmask 195584
    %v241 = vsel %vm239, %v229, 0
    %vm243 = vcmask 1043456
    %v245 = vsel %vm243, %v237, 0
    %247 = vmatprep.subr.bf16.mxu0 0
    %248 = vmatpush1.bf16.msra.mxu0 %v236
    %249 = vmatprep.subr.bf16.mxu0 0
    %250 = vmatpush1.bf16.msra.mxu0 %v245
    %251 = vmatprep.subr.bf16.mxu0 0
    %252 = vmatpush1.bf16.msra.mxu0 0
    %253 = vmatprep.subr.bf16.mxu0 0
    %254 = vmatpush1.bf16.msra.mxu0 0
    %255 = vmatprep.subr.bf16.mxu0 0
    %256 = vmatpush1.bf16.msra.mxu0 0
    %257 = vmatprep.subr.bf16.mxu0 0
    %258 = vmatpush1.bf16.msra.mxu0 0
    %259 = vmatprep.subr.bf16.mxu0 0
    %260 = vmatpush1.bf16.msra.mxu0 0
    %261 = vmatprep.subr.bf16.mxu0 0
    %262 = vmatpush1.bf16.msra.mxu0 0
    %263 = vmatprep.subr.bf16.mxu0 0
    %264 = vmatpush1.bf16.msra.mxu0 0
    %265 = vmatprep.subr.bf16.mxu0 0
    %266 = vmatpush1.bf16.msra.mxu0 0
    %267 = vmatprep.subr.bf16.mxu0 0
    %268 = vmatpush1.bf16.msra.mxu0 0
    %269 = vmatprep.subr.bf16.mxu0 0
    %270 = vmatpush1.bf16.msra.mxu0 0
    %271 = vmatprep.subr.bf16.mxu0 0
    %272 = vmatpush1.bf16.msra.mxu0 0
    %273 = vmatprep.subr.bf16.mxu0 0
    %274 = vmatpush1.bf16.msra.mxu0 0
    %275 = vmatprep.subr.bf16.mxu0 0
    %276 = vmatpush1.bf16.msra.mxu0 0
    %277 = vmatprep.subr.bf16.mxu0 0
    %278 = vmatpush1.bf16.msra.mxu0 0
    %279 = vmatprep.mubr.bf16.mxu0 0
    %280 = vmatmul.mubr.bf16.gmra.mrb[0].mxu0 %v241
    %v281 = vpop.f32.mrb[0].mxu0
    %v282 = vadd.f32 0.0, %v281
    %v283 = vpop.f32.mrb[0].mxu0
    %v284 = vpop.f32.mrb[0].mxu0
    %v285 = vpop.f32.mrb[0].mxu0
    %286 = vdwg.mxu0
    %v287 = vld [vmem:[%s2] sm:$0x1]
    %v288 = vpack.c.bf16 %v212, %v212
    %v289 = vpack.c.bf16 %v282, %v282
    %v290 = vlaneseq
    %v291 = vshrl.u32 %v290, 7
    %v292 = vsub.s32 0, %v291
    %v293 = vrot.slane %v287, %v292
    %vm294 = vcmask 130048
    %v296 = vsel %vm294, %v288, 0
    %v299 = vsel %vm294, %v289, 0
    %301 = vmatprep.subr.bf16.mxu0 0
    %302 = vmatpush1.bf16.xpose.msra.mxu0 %v299
    %303 = vmatprep.subr.bf16.mxu0 0
    %304 = vmatpush1.bf16.xpose.msra.mxu0 0
    %305 = vmatprep.subr.bf16.mxu0 0
    %306 = vmatpush1.bf16.xpose.msra.mxu0 0
    %307 = vmatprep.subr.bf16.mxu0 0
    %308 = vmatpush1.bf16.xpose.msra.mxu0 0
    %309 = vmatprep.subr.bf16.mxu0 0
    %310 = vmatpush1.bf16.xpose.msra.mxu0 0
    %311 = vmatprep.subr.bf16.mxu0 0
    %312 = vmatpush1.bf16.xpose.msra.mxu0 0
    %313 = vmatprep.subr.bf16.mxu0 0
    %314 = vmatpush1.bf16.xpose.msra.mxu0 0
    %315 = vmatprep.subr.bf16.mxu0 0
    %316 = vmatpush1.bf16.xpose.msra.mxu0 0
    %317 = vmatprep.subr.bf16.mxu0 0
    %318 = vmatpush1.bf16.xpose.msra.mxu0 0
    %319 = vmatprep.subr.bf16.mxu0 0
    %320 = vmatpush1.bf16.xpose.msra.mxu0 0
    %321 = vmatprep.subr.bf16.mxu0 0
    %322 = vmatpush1.bf16.xpose.msra.mxu0 0
    %323 = vmatprep.subr.bf16.mxu0 0
    %324 = vmatpush1.bf16.xpose.msra.mxu0 0
    %325 = vmatprep.subr.bf16.mxu0 0
    %326 = vmatpush1.bf16.xpose.msra.mxu0 0
    %327 = vmatprep.subr.bf16.mxu0 0
    %328 = vmatpush1.bf16.xpose.msra.mxu0 0
    %329 = vmatprep.subr.bf16.mxu0 0
    %330 = vmatpush1.bf16.xpose.msra.mxu0 0
    %331 = vmatprep.subr.bf16.mxu0 0
    %332 = vmatpush1.bf16.xpose.msra.mxu0 0
    %333 = vmatprep.mubr.bf16.mxu0 0
    %334 = vmatmul.mubr.bf16.gmra.mrb[0].mxu0 %v296
    %v335 = vpop.f32.mrb[0].mxu0
    %v336 = vadd.f32 %v293, %v335
    %v337 = vpop.f32.mrb[0].mxu0
    %v338 = vpop.f32.mrb[0].mxu0
    %v339 = vpop.f32.mrb[0].mxu0
    %340 = vdwg.mxu0
    %vm341 = vcmask 31744
    %v342 = vsel %vm341, %v336, -inf
    %343 = vmax.xlane.f32.xlu0 %v342
    %v344 = vpop.xlane.xlu0 %343
    %v345 = vsub.f32 %v336, %v344
    %v346 = vmul.f32 %v345, 1.442695
    %v347 = vpow.pop %v346
    %v348 = vsel %vm341, %v347, 0.0
    %349 = vadd.xlane.f32.xlu0 %v348
    %v350 = vpop.xlane.xlu0 %349
    %v351 = vrcp.pop %v350
    %v352 = vmul.f32 %v347, %v351
    %v353 = vpack.c.bf16 %v352, %v352
    %355 = vrot.lane.b32.xlu0 %v289, 64
    %v356 = vpop.permute.xlu0 %355
    %v358 = vsel %vm341, %v353, 0
    %vm360 = vcmask 1041408
    %v362 = vsel %vm360, %v356, 0
    %364 = vmatprep.subr.bf16.mxu0 0
    %365 = vmatpush1.bf16.msra.mxu0 %v362
    %366 = vmatprep.subr.bf16.mxu0 0
    %367 = vmatpush1.bf16.msra.mxu0 0
    %368 = vmatprep.subr.bf16.mxu0 0
    %369 = vmatpush1.bf16.msra.mxu0 0
    %370 = vmatprep.subr.bf16.mxu0 0
    %371 = vmatpush1.bf16.msra.mxu0 0
    %372 = vmatprep.subr.bf16.mxu0 0
    %373 = vmatpush1.bf16.msra.mxu0 0
    %374 = vmatprep.subr.bf16.mxu0 0
    %375 = vmatpush1.bf16.msra.mxu0 0
    %376 = vmatprep.subr.bf16.mxu0 0
    %377 = vmatpush1.bf16.msra.mxu0 0
    %378 = vmatprep.subr.bf16.mxu0 0
    %379 = vmatpush1.bf16.msra.mxu0 0
    %380 = vmatprep.subr.bf16.mxu0 0
    %381 = vmatpush1.bf16.msra.mxu0 0
    %382 = vmatprep.subr.bf16.mxu0 0
    %383 = vmatpush1.bf16.msra.mxu0 0
    %384 = vmatprep.subr.bf16.mxu0 0
    %385 = vmatpush1.bf16.msra.mxu0 0
    %386 = vmatprep.subr.bf16.mxu0 0
    %387 = vmatpush1.bf16.msra.mxu0 0
    %388 = vmatprep.subr.bf16.mxu0 0
    %389 = vmatpush1.bf16.msra.mxu0 0
    %390 = vmatprep.subr.bf16.mxu0 0
    %391 = vmatpush1.bf16.msra.mxu0 0
    %392 = vmatprep.subr.bf16.mxu0 0
    %393 = vmatpush1.bf16.msra.mxu0 0
    %394 = vmatprep.subr.bf16.mxu0 0
    %395 = vmatpush1.bf16.msra.mxu0 0
    %396 = vmatprep.mubr.bf16.mxu0 0
    %397 = vmatmul.mubr.bf16.gmra.mrb[0].mxu0 %v358
    %v398 = vpop.f32.mrb[0].mxu0
    %v399 = vadd.f32 0.0, %v398
    %v400 = vpop.f32.mrb[0].mxu0
    %v401 = vpop.f32.mrb[0].mxu0
    %v402 = vpop.f32.mrb[0].mxu0
    %403 = vdwg.mxu0
    %v404 = vpack.c.bf16 %v399, %v399
    %406 = vrot.lane.b32.xlu0 %v288, 112
    %v407 = vpop.permute.xlu0 %406
    %408 = vrot.lane.b32.xlu0 %v289, 112
    %v409 = vpop.permute.xlu0 %408
    %v411 = vsel %vm294, %v407, 0
    %v414 = vsel %vm294, %v409, 0
    %416 = vmatprep.subr.bf16.mxu0 0
    %417 = vmatpush1.bf16.xpose.msra.mxu0 %v414
    %418 = vmatprep.subr.bf16.mxu0 0
    %419 = vmatpush1.bf16.xpose.msra.mxu0 0
    %420 = vmatprep.subr.bf16.mxu0 0
    %421 = vmatpush1.bf16.xpose.msra.mxu0 0
    %422 = vmatprep.subr.bf16.mxu0 0
    %423 = vmatpush1.bf16.xpose.msra.mxu0 0
    %424 = vmatprep.subr.bf16.mxu0 0
    %425 = vmatpush1.bf16.xpose.msra.mxu0 0
    %426 = vmatprep.subr.bf16.mxu0 0
    %427 = vmatpush1.bf16.xpose.msra.mxu0 0
    %428 = vmatprep.subr.bf16.mxu0 0
    %429 = vmatpush1.bf16.xpose.msra.mxu0 0
    %430 = vmatprep.subr.bf16.mxu0 0
    %431 = vmatpush1.bf16.xpose.msra.mxu0 0
    %432 = vmatprep.subr.bf16.mxu0 0
    %433 = vmatpush1.bf16.xpose.msra.mxu0 0
    %434 = vmatprep.subr.bf16.mxu0 0
    %435 = vmatpush1.bf16.xpose.msra.mxu0 0
    %436 = vmatprep.subr.bf16.mxu0 0
    %437 = vmatpush1.bf16.xpose.msra.mxu0 0
    %438 = vmatprep.subr.bf16.mxu0 0
    %439 = vmatpush1.bf16.xpose.msra.mxu0 0
    %440 = vmatprep.subr.bf16.mxu0 0
    %441 = vmatpush1.bf16.xpose.msra.mxu0 0
    %442 = vmatprep.subr.bf16.mxu0 0
    %443 = vmatpush1.bf16.xpose.msra.mxu0 0
    %444 = vmatprep.subr.bf16.mxu0 0
    %445 = vmatpush1.bf16.xpose.msra.mxu0 0
    %446 = vmatprep.subr.bf16.mxu0 0
    %447 = vmatpush1.bf16.xpose.msra.mxu0 0
    %448 = vmatprep.mubr.bf16.mxu0 0
    %449 = vmatmul.mubr.bf16.gmra.mrb[0].mxu0 %v411
    %v450 = vpop.f32.mrb[0].mxu0
    %v451 = vadd.f32 %v293, %v450
    %v452 = vpop.f32.mrb[0].mxu0
    %v453 = vpop.f32.mrb[0].mxu0
    %v454 = vpop.f32.mrb[0].mxu0
    %455 = vdwg.mxu0
    %v456 = vsel %vm341, %v451, -inf
    %457 = vmax.xlane.f32.xlu0 %v456
    %v458 = vpop.xlane.xlu0 %457
    %v459 = vsub.f32 %v451, %v458
    %v460 = vmul.f32 %v459, 1.442695
    %v461 = vpow.pop %v460
    %v462 = vsel %vm341, %v461, 0.0
    %463 = vadd.xlane.f32.xlu0 %v462
    %v464 = vpop.xlane.xlu0 %463
    %v465 = vrcp.pop %v464
    %v466 = vmul.f32 %v461, %v465
    %v467 = vpack.c.bf16 %v466, %v466
    %468 = vrot.lane.b32.xlu0 %v289, 48
    %v469 = vpop.permute.xlu0 %468
    %v471 = vsel %vm341, %v467, 0
    %v474 = vsel %vm360, %v469, 0
    %476 = vmatprep.subr.bf16.mxu0 0
    %477 = vmatpush1.bf16.msra.mxu0 %v474
    %478 = vmatprep.subr.bf16.mxu0 0
    %479 = vmatpush1.bf16.msra.mxu0 0
    %480 = vmatprep.subr.bf16.mxu0 0
    %481 = vmatpush1.bf16.msra.mxu0 0
    %482 = vmatprep.subr.bf16.mxu0 0
    %483 = vmatpush1.bf16.msra.mxu0 0
    %484 = vmatprep.subr.bf16.mxu0 0
    %485 = vmatpush1.bf16.msra.mxu0 0
    %486 = vmatprep.subr.bf16.mxu0 0
    %487 = vmatpush1.bf16.msra.mxu0 0
    %488 = vmatprep.subr.bf16.mxu0 0
    %489 = vmatpush1.bf16.msra.mxu0 0
    %490 = vmatprep.subr.bf16.mxu0 0
    %491 = vmatpush1.bf16.msra.mxu0 0
    %492 = vmatprep.subr.bf16.mxu0 0
    %493 = vmatpush1.bf16.msra.mxu0 0
    %494 = vmatprep.subr.bf16.mxu0 0
    %495 = vmatpush1.bf16.msra.mxu0 0
    %496 = vmatprep.subr.bf16.mxu0 0
    %497 = vmatpush1.bf16.msra.mxu0 0
    %498 = vmatprep.subr.bf16.mxu0 0
    %499 = vmatpush1.bf16.msra.mxu0 0
    %500 = vmatprep.subr.bf16.mxu0 0
    %501 = vmatpush1.bf16.msra.mxu0 0
    %502 = vmatprep.subr.bf16.mxu0 0
    %503 = vmatpush1.bf16.msra.mxu0 0
    %504 = vmatprep.subr.bf16.mxu0 0
    %505 = vmatpush1.bf16.msra.mxu0 0
    %506 = vmatprep.subr.bf16.mxu0 0
    %507 = vmatpush1.bf16.msra.mxu0 0
    %508 = vmatprep.mubr.bf16.mxu0 0
    %509 = vmatmul.mubr.bf16.gmra.mrb[0].mxu0 %v471
    %v510 = vpop.f32.mrb[0].mxu0
    %v511 = vadd.f32 0.0, %v510
    %v512 = vpop.f32.mrb[0].mxu0
    %v513 = vpop.f32.mrb[0].mxu0
    %v514 = vpop.f32.mrb[0].mxu0
    %515 = vdwg.mxu0
    %v516 = vpack.c.bf16 %v511, %v511
    %v519 = vunpack.c.l.b16 %v223
    %v520 = vunpack.c.l.b16 %v224
    %v521 = vpack.c.b16 %v520, %v519
    %v524 = vsel %vm294, %v516, 0
    %526 = vmatprep.subr.bf16.mxu0 0
    %527 = vmatpush1.bf16.msra.mxu0 %v521
    %528 = vmatprep.subr.bf16.mxu0 0
    %529 = vmatpush1.bf16.msra.mxu0 0
    %530 = vmatprep.subr.bf16.mxu0 0
    %531 = vmatpush1.bf16.msra.mxu0 0
    %532 = vmatprep.subr.bf16.mxu0 0
    %533 = vmatpush1.bf16.msra.mxu0 0
    %534 = vmatprep.subr.bf16.mxu0 0
    %535 = vmatpush1.bf16.msra.mxu0 0
    %536 = vmatprep.subr.bf16.mxu0 0
    %537 = vmatpush1.bf16.msra.mxu0 0
    %538 = vmatprep.subr.bf16.mxu0 0
    %539 = vmatpush1.bf16.msra.mxu0 0
    %540 = vmatprep.subr.bf16.mxu0 0
    %541 = vmatpush1.bf16.msra.mxu0 0
    %542 = vmatprep.subr.bf16.mxu0 0
    %543 = vmatpush1.bf16.msra.mxu0 0
    %544 = vmatprep.subr.bf16.mxu0 0
    %545 = vmatpush1.bf16.msra.mxu0 0
    %546 = vmatprep.subr.bf16.mxu0 0
    %547 = vmatpush1.bf16.msra.mxu0 0
    %548 = vmatprep.subr.bf16.mxu0 0
    %549 = vmatpush1.bf16.msra.mxu0 0
    %550 = vmatprep.subr.bf16.mxu0 0
    %551 = vmatpush1.bf16.msra.mxu0 0
    %552 = vmatprep.subr.bf16.mxu0 0
    %553 = vmatpush1.bf16.msra.mxu0 0
    %554 = vmatprep.subr.bf16.mxu0 0
    %555 = vmatpush1.bf16.msra.mxu0 0
    %556 = vmatprep.subr.bf16.mxu0 0
    %557 = vmatpush1.bf16.msra.mxu0 0
    %558 = vmatprep.mubr.bf16.mxu0 0
    %559 = vmatmul.mubr.bf16.gmra.mrb[0].mxu0 %v524
    %v560 = vpop.f32.mrb[0].mxu0
    %v561 = vadd.f32 0.0, %v560
    %v562 = vpop.f32.mrb[0].mxu0
    %v563 = vpop.f32.mrb[0].mxu0
    %v564 = vpop.f32.mrb[0].mxu0
    %565 = vdwg.mxu0
    %v568 = vunpack.c.l.b16 %v221
    %v569 = vunpack.c.l.b16 %v222
    %v570 = vpack.c.b16 %v569, %v568
    %v573 = vsel %vm294, %v404, 0
    %575 = vmatprep.subr.bf16.mxu0 0
    %576 = vmatpush1.bf16.msra.mxu0 %v570
    %577 = vmatprep.subr.bf16.mxu0 0
    %578 = vmatpush1.bf16.msra.mxu0 0
    %579 = vmatprep.subr.bf16.mxu0 0
    %580 = vmatpush1.bf16.msra.mxu0 0
    %581 = vmatprep.subr.bf16.mxu0 0
    %582 = vmatpush1.bf16.msra.mxu0 0
    %583 = vmatprep.subr.bf16.mxu0 0
    %584 = vmatpush1.bf16.msra.mxu0 0
    %585 = vmatprep.subr.bf16.mxu0 0
    %586 = vmatpush1.bf16.msra.mxu0 0
    %587 = vmatprep.subr.bf16.mxu0 0
    %588 = vmatpush1.bf16.msra.mxu0 0
    %589 = vmatprep.subr.bf16.mxu0 0
    %590 = vmatpush1.bf16.msra.mxu0 0
    %591 = vmatprep.subr.bf16.mxu0 0
    %592 = vmatpush1.bf16.msra.mxu0 0
    %593 = vmatprep.subr.bf16.mxu0 0
    %594 = vmatpush1.bf16.msra.mxu0 0
    %595 = vmatprep.subr.bf16.mxu0 0
    %596 = vmatpush1.bf16.msra.mxu0 0
    %597 = vmatprep.subr.bf16.mxu0 0
    %598 = vmatpush1.bf16.msra.mxu0 0
    %599 = vmatprep.subr.bf16.mxu0 0
    %600 = vmatpush1.bf16.msra.mxu0 0
    %601 = vmatprep.subr.bf16.mxu0 0
    %602 = vmatpush1.bf16.msra.mxu0 0
    %603 = vmatprep.subr.bf16.mxu0 0
    %604 = vmatpush1.bf16.msra.mxu0 0
    %605 = vmatprep.subr.bf16.mxu0 0
    %606 = vmatpush1.bf16.msra.mxu0 0
    %607 = vmatprep.mubr.bf16.mxu0 0
    %608 = vmatmul.mubr.bf16.gmra.mrb[0].mxu0 %v573
    %v609 = vpop.f32.mrb[0].mxu0
    %v610 = vadd.f32 %v561, %v609
    %v611 = vpop.f32.mrb[0].mxu0
    %v612 = vpop.f32.mrb[0].mxu0
    %v613 = vpop.f32.mrb[0].mxu0
    %614 = vdwg.mxu0
    %615 = vrot.lane.b32.xlu0 %v288, 96
    %v616 = vpop.permute.xlu0 %615
    %617 = vrot.lane.b32.xlu0 %v289, 96
    %v618 = vpop.permute.xlu0 %617
    %v620 = vsel %vm294, %v616, 0
    %v623 = vsel %vm294, %v618, 0
    %625 = vmatprep.subr.bf16.mxu0 0
    %626 = vmatpush1.bf16.xpose.msra.mxu0 %v623
    %627 = vmatprep.subr.bf16.mxu0 0
    %628 = vmatpush1.bf16.xpose.msra.mxu0 0
    %629 = vmatprep.subr.bf16.mxu0 0
    %630 = vmatpush1.bf16.xpose.msra.mxu0 0
    %631 = vmatprep.subr.bf16.mxu0 0
    %632 = vmatpush1.bf16.xpose.msra.mxu0 0
    %633 = vmatprep.subr.bf16.mxu0 0
    %634 = vmatpush1.bf16.xpose.msra.mxu0 0
    %635 = vmatprep.subr.bf16.mxu0 0
    %636 = vmatpush1.bf16.xpose.msra.mxu0 0
    %637 = vmatprep.subr.bf16.mxu0 0
    %638 = vmatpush1.bf16.xpose.msra.mxu0 0
    %639 = vmatprep.subr.bf16.mxu0 0
    %640 = vmatpush1.bf16.xpose.msra.mxu0 0
    %641 = vmatprep.subr.bf16.mxu0 0
    %642 = vmatpush1.bf16.xpose.msra.mxu0 0
    %643 = vmatprep.subr.bf16.mxu0 0
    %644 = vmatpush1.bf16.xpose.msra.mxu0 0
    %645 = vmatprep.subr.bf16.mxu0 0
    %646 = vmatpush1.bf16.xpose.msra.mxu0 0
    %647 = vmatprep.subr.bf16.mxu0 0
    %648 = vmatpush1.bf16.xpose.msra.mxu0 0
    %649 = vmatprep.subr.bf16.mxu0 0
    %650 = vmatpush1.bf16.xpose.msra.mxu0 0
    %651 = vmatprep.subr.bf16.mxu0 0
    %652 = vmatpush1.bf16.xpose.msra.mxu0 0
    %653 = vmatprep.subr.bf16.mxu0 0
    %654 = vmatpush1.bf16.xpose.msra.mxu0 0
    %655 = vmatprep.subr.bf16.mxu0 0
    %656 = vmatpush1.bf16.xpose.msra.mxu0 0
    %657 = vmatprep.mubr.bf16.mxu0 0
    %658 = vmatmul.mubr.bf16.gmra.mrb[0].mxu0 %v620
    %v659 = vpop.f32.mrb[0].mxu0
    %v660 = vadd.f32 %v293, %v659
    %v661 = vpop.f32.mrb[0].mxu0
    %v662 = vpop.f32.mrb[0].mxu0
    %v663 = vpop.f32.mrb[0].mxu0
    %664 = vdwg.mxu0
    %v665 = vsel %vm341, %v660, -inf
    %666 = vmax.xlane.f32.xlu0 %v665
    %v667 = vpop.xlane.xlu0 %666
    %v668 = vsub.f32 %v660, %v667
    %v669 = vmul.f32 %v668, 1.442695
    %v670 = vpow.pop %v669
    %v671 = vsel %vm341, %v670, 0.0
    %672 = vadd.xlane.f32.xlu0 %v671
    %v673 = vpop.xlane.xlu0 %672
    %v674 = vrcp.pop %v673
    %v675 = vmul.f32 %v670, %v674
    %v676 = vpack.c.bf16 %v675, %v675
    %677 = vrot.lane.b32.xlu0 %v289, 32
    %v678 = vpop.permute.xlu0 %677
    %v680 = vsel %vm341, %v676, 0
    %v683 = vsel %vm360, %v678, 0
    %685 = vmatprep.subr.bf16.mxu0 0
    %686 = vmatpush1.bf16.msra.mxu0 %v683
    %687 = vmatprep.subr.bf16.mxu0 0
    %688 = vmatpush1.bf16.msra.mxu0 0
    %689 = vmatprep.subr.bf16.mxu0 0
    %690 = vmatpush1.bf16.msra.mxu0 0
    %691 = vmatprep.subr.bf16.mxu0 0
    %692 = vmatpush1.bf16.msra.mxu0 0
    %693 = vmatprep.subr.bf16.mxu0 0
    %694 = vmatpush1.bf16.msra.mxu0 0
    %695 = vmatprep.subr.bf16.mxu0 0
    %696 = vmatpush1.bf16.msra.mxu0 0
    %697 = vmatprep.subr.bf16.mxu0 0
    %698 = vmatpush1.bf16.msra.mxu0 0
    %699 = vmatprep.subr.bf16.mxu0 0
    %700 = vmatpush1.bf16.msra.mxu0 0
    %701 = vmatprep.subr.bf16.mxu0 0
    %702 = vmatpush1.bf16.msra.mxu0 0
    %703 = vmatprep.subr.bf16.mxu0 0
    %704 = vmatpush1.bf16.msra.mxu0 0
    %705 = vmatprep.subr.bf16.mxu0 0
    %706 = vmatpush1.bf16.msra.mxu0 0
    %707 = vmatprep.subr.bf16.mxu0 0
    %708 = vmatpush1.bf16.msra.mxu0 0
    %709 = vmatprep.subr.bf16.mxu0 0
    %710 = vmatpush1.bf16.msra.mxu0 0
    %711 = vmatprep.subr.bf16.mxu0 0
    %712 = vmatpush1.bf16.msra.mxu0 0
    %713 = vmatprep.subr.bf16.mxu0 0
    %714 = vmatpush1.bf16.msra.mxu0 0
    %715 = vmatprep.subr.bf16.mxu0 0
    %716 = vmatpush1.bf16.msra.mxu0 0
    %717 = vmatprep.mubr.bf16.mxu0 0
    %718 = vmatmul.mubr.bf16.gmra.mrb[0].mxu0 %v680
    %v719 = vpop.f32.mrb[0].mxu0
    %v720 = vadd.f32 0.0, %v719
    %v721 = vpop.f32.mrb[0].mxu0
    %v722 = vpop.f32.mrb[0].mxu0
    %v723 = vpop.f32.mrb[0].mxu0
    %724 = vdwg.mxu0
    %v725 = vpack.c.bf16 %v720, %v720
    %v728 = vunpack.c.l.b16 %v225
    %v729 = vunpack.c.l.b16 %v226
    %v730 = vpack.c.b16 %v729, %v728
    %v733 = vsel %vm294, %v725, 0
    %735 = vmatprep.subr.bf16.mxu0 0
    %736 = vmatpush1.bf16.msra.mxu0 %v730
    %737 = vmatprep.subr.bf16.mxu0 0
    %738 = vmatpush1.bf16.msra.mxu0 0
    %739 = vmatprep.subr.bf16.mxu0 0
    %740 = vmatpush1.bf16.msra.mxu0 0
    %741 = vmatprep.subr.bf16.mxu0 0
    %742 = vmatpush1.bf16.msra.mxu0 0
    %743 = vmatprep.subr.bf16.mxu0 0
    %744 = vmatpush1.bf16.msra.mxu0 0
    %745 = vmatprep.subr.bf16.mxu0 0
    %746 = vmatpush1.bf16.msra.mxu0 0
    %747 = vmatprep.subr.bf16.mxu0 0
    %748 = vmatpush1.bf16.msra.mxu0 0
    %749 = vmatprep.subr.bf16.mxu0 0
    %750 = vmatpush1.bf16.msra.mxu0 0
    %751 = vmatprep.subr.bf16.mxu0 0
    %752 = vmatpush1.bf16.msra.mxu0 0
    %753 = vmatprep.subr.bf16.mxu0 0
    %754 = vmatpush1.bf16.msra.mxu0 0
    %755 = vmatprep.subr.bf16.mxu0 0
    %756 = vmatpush1.bf16.msra.mxu0 0
    %757 = vmatprep.subr.bf16.mxu0 0
    %758 = vmatpush1.bf16.msra.mxu0 0
    %759 = vmatprep.subr.bf16.mxu0 0
    %760 = vmatpush1.bf16.msra.mxu0 0
    %761 = vmatprep.subr.bf16.mxu0 0
    %762 = vmatpush1.bf16.msra.mxu0 0
    %763 = vmatprep.subr.bf16.mxu0 0
    %764 = vmatpush1.bf16.msra.mxu0 0
    %765 = vmatprep.subr.bf16.mxu0 0
    %766 = vmatpush1.bf16.msra.mxu0 0
    %767 = vmatprep.mubr.bf16.mxu0 0
    %768 = vmatmul.mubr.bf16.gmra.mrb[0].mxu0 %v733
    %v769 = vpop.f32.mrb[0].mxu0
    %v770 = vadd.f32 0.0, %v769
    %v771 = vpop.f32.mrb[0].mxu0
    %v772 = vpop.f32.mrb[0].mxu0
    %v773 = vpop.f32.mrb[0].mxu0
    %774 = vdwg.mxu0
    %v775 = vadd.f32 %v610, %v770
    %776 = vrot.lane.b32.xlu0 %v288, 80
    %v777 = vpop.permute.xlu0 %776
    %778 = vrot.lane.b32.xlu0 %v289, 80
    %v779 = vpop.permute.xlu0 %778
    %v781 = vsel %vm294, %v777, 0
    %v784 = vsel %vm294, %v779, 0
    %786 = vmatprep.subr.bf16.mxu0 0
    %787 = vmatpush1.bf16.xpose.msra.mxu0 %v784
    %788 = vmatprep.subr.bf16.mxu0 0
    %789 = vmatpush1.bf16.xpose.msra.mxu0 0
    %790 = vmatprep.subr.bf16.mxu0 0
    %791 = vmatpush1.bf16.xpose.msra.mxu0 0
    %792 = vmatprep.subr.bf16.mxu0 0
    %793 = vmatpush1.bf16.xpose.msra.mxu0 0
    %794 = vmatprep.subr.bf16.mxu0 0
    %795 = vmatpush1.bf16.xpose.msra.mxu0 0
    %796 = vmatprep.subr.bf16.mxu0 0
    %797 = vmatpush1.bf16.xpose.msra.mxu0 0
    %798 = vmatprep.subr.bf16.mxu0 0
    %799 = vmatpush1.bf16.xpose.msra.mxu0 0
    %800 = vmatprep.subr.bf16.mxu0 0
    %801 = vmatpush1.bf16.xpose.msra.mxu0 0
    %802 = vmatprep.subr.bf16.mxu0 0
    %803 = vmatpush1.bf16.xpose.msra.mxu0 0
    %804 = vmatprep.subr.bf16.mxu0 0
    %805 = vmatpush1.bf16.xpose.msra.mxu0 0
    %806 = vmatprep.subr.bf16.mxu0 0
    %807 = vmatpush1.bf16.xpose.msra.mxu0 0
    %808 = vmatprep.subr.bf16.mxu0 0
    %809 = vmatpush1.bf16.xpose.msra.mxu0 0
    %810 = vmatprep.subr.bf16.mxu0 0
    %811 = vmatpush1.bf16.xpose.msra.mxu0 0
    %812 = vmatprep.subr.bf16.mxu0 0
    %813 = vmatpush1.bf16.xpose.msra.mxu0 0
    %814 = vmatprep.subr.bf16.mxu0 0
    %815 = vmatpush1.bf16.xpose.msra.mxu0 0
    %816 = vmatprep.subr.bf16.mxu0 0
    %817 = vmatpush1.bf16.xpose.msra.mxu0 0
    %818 = vmatprep.mubr.bf16.mxu0 0
    %819 = vmatmul.mubr.bf16.gmra.mrb[0].mxu0 %v781
    %v820 = vpop.f32.mrb[0].mxu0
    %v821 = vadd.f32 %v293, %v820
    %v822 = vpop.f32.mrb[0].mxu0
    %v823 = vpop.f32.mrb[0].mxu0
    %v824 = vpop.f32.mrb[0].mxu0
    %825 = vdwg.mxu0
    %v826 = vsel %vm341, %v821, -inf
    %827 = vmax.xlane.f32.xlu0 %v826
    %v828 = vpop.xlane.xlu0 %827
    %v829 = vsub.f32 %v821, %v828
    %v830 = vmul.f32 %v829, 1.442695
    %v831 = vpow.pop %v830
    %v832 = vsel %vm341, %v831, 0.0
    %833 = vadd.xlane.f32.xlu0 %v832
    %v834 = vpop.xlane.xlu0 %833
    %v835 = vrcp.pop %v834
    %v836 = vmul.f32 %v831, %v835
    %v837 = vpack.c.bf16 %v836, %v836
    %838 = vrot.lane.b32.xlu0 %v289, 16
    %v839 = vpop.permute.xlu0 %838
    %v841 = vsel %vm341, %v837, 0
    %v844 = vsel %vm360, %v839, 0
    %846 = vmatprep.subr.bf16.mxu0 0
    %847 = vmatpush1.bf16.msra.mxu0 %v844
    %848 = vmatprep.subr.bf16.mxu0 0
    %849 = vmatpush1.bf16.msra.mxu0 0
    %850 = vmatprep.subr.bf16.mxu0 0
    %851 = vmatpush1.bf16.msra.mxu0 0
    %852 = vmatprep.subr.bf16.mxu0 0
    %853 = vmatpush1.bf16.msra.mxu0 0
    %854 = vmatprep.subr.bf16.mxu0 0
    %855 = vmatpush1.bf16.msra.mxu0 0
    %856 = vmatprep.subr.bf16.mxu0 0
    %857 = vmatpush1.bf16.msra.mxu0 0
    %858 = vmatprep.subr.bf16.mxu0 0
    %859 = vmatpush1.bf16.msra.mxu0 0
    %860 = vmatprep.subr.bf16.mxu0 0
    %861 = vmatpush1.bf16.msra.mxu0 0
    %862 = vmatprep.subr.bf16.mxu0 0
    %863 = vmatpush1.bf16.msra.mxu0 0
    %864 = vmatprep.subr.bf16.mxu0 0
    %865 = vmatpush1.bf16.msra.mxu0 0
    %866 = vmatprep.subr.bf16.mxu0 0
    %867 = vmatpush1.bf16.msra.mxu0 0
    %868 = vmatprep.subr.bf16.mxu0 0
    %869 = vmatpush1.bf16.msra.mxu0 0
    %870 = vmatprep.subr.bf16.mxu0 0
    %871 = vmatpush1.bf16.msra.mxu0 0
    %872 = vmatprep.subr.bf16.mxu0 0
    %873 = vmatpush1.bf16.msra.mxu0 0
    %874 = vmatprep.subr.bf16.mxu0 0
    %875 = vmatpush1.bf16.msra.mxu0 0
    %876 = vmatprep.subr.bf16.mxu0 0
    %877 = vmatpush1.bf16.msra.mxu0 0
    %878 = vmatprep.mubr.bf16.mxu0 0
    %879 = vmatmul.mubr.bf16.gmra.mrb[0].mxu0 %v841
    %v880 = vpop.f32.mrb[0].mxu0
    %v881 = vadd.f32 0.0, %v880
    %v882 = vpop.f32.mrb[0].mxu0
    %v883 = vpop.f32.mrb[0].mxu0
    %v884 = vpop.f32.mrb[0].mxu0
    %885 = vdwg.mxu0
    %v886 = vpack.c.bf16 %v881, %v881
    %v889 = vunpack.c.l.b16 %v227
    %v890 = vunpack.c.l.b16 %v228
    %v891 = vpack.c.b16 %v890, %v889
    %v894 = vsel %vm294, %v886, 0
    %896 = vmatprep.subr.bf16.mxu0 0
    %897 = vmatpush1.bf16.msra.mxu0 %v891
    %898 = vmatprep.subr.bf16.mxu0 0
    %899 = vmatpush1.bf16.msra.mxu0 0
    %900 = vmatprep.subr.bf16.mxu0 0
    %901 = vmatpush1.bf16.msra.mxu0 0
    %902 = vmatprep.subr.bf16.mxu0 0
    %903 = vmatpush1.bf16.msra.mxu0 0
    %904 = vmatprep.subr.bf16.mxu0 0
    %905 = vmatpush1.bf16.msra.mxu0 0
    %906 = vmatprep.subr.bf16.mxu0 0
    %907 = vmatpush1.bf16.msra.mxu0 0
    %908 = vmatprep.subr.bf16.mxu0 0
    %909 = vmatpush1.bf16.msra.mxu0 0
    %910 = vmatprep.subr.bf16.mxu0 0
    %911 = vmatpush1.bf16.msra.mxu0 0
    %912 = vmatprep.subr.bf16.mxu0 0
    %913 = vmatpush1.bf16.msra.mxu0 0
    %914 = vmatprep.subr.bf16.mxu0 0
    %915 = vmatpush1.bf16.msra.mxu0 0
    %916 = vmatprep.subr.bf16.mxu0 0
    %917 = vmatpush1.bf16.msra.mxu0 0
    %918 = vmatprep.subr.bf16.mxu0 0
    %919 = vmatpush1.bf16.msra.mxu0 0
    %920 = vmatprep.subr.bf16.mxu0 0
    %921 = vmatpush1.bf16.msra.mxu0 0
    %922 = vmatprep.subr.bf16.mxu0 0
    %923 = vmatpush1.bf16.msra.mxu0 0
    %924 = vmatprep.subr.bf16.mxu0 0
    %925 = vmatpush1.bf16.msra.mxu0 0
    %926 = vmatprep.subr.bf16.mxu0 0
    %927 = vmatpush1.bf16.msra.mxu0 0
    %928 = vmatprep.mubr.bf16.mxu0 0
    %929 = vmatmul.mubr.bf16.gmra.mrb[0].mxu0 %v894
    %v930 = vpop.f32.mrb[0].mxu0
    %v931 = vadd.f32 0.0, %v930
    %v932 = vpop.f32.mrb[0].mxu0
    %v933 = vpop.f32.mrb[0].mxu0
    %v934 = vpop.f32.mrb[0].mxu0
    %935 = vdwg.mxu0
    %v936 = vadd.f32 %v775, %v931
    %937 = vst [vmem:[#allocation13] sm:$0xff] %v936
    %s938 = scalar_lea.vmem [#allocation5], 2
    %v939 = vld [vmem:[%s938] sm:$0x3]
    %v941 = vsel %vm239, %v939, 0
    %943 = vmatprep.subr.bf16.mxu0 0
    %944 = vmatpush1.bf16.msra.mxu0 %v236
    %945 = vmatprep.subr.bf16.mxu0 0
    %946 = vmatpush1.bf16.msra.mxu0 %v245
    %947 = vmatprep.subr.bf16.mxu0 0
    %948 = vmatpush1.bf16.msra.mxu0 0
    %949 = vmatprep.subr.bf16.mxu0 0
    %950 = vmatpush1.bf16.msra.mxu0 0
    %951 = vmatprep.subr.bf16.mxu0 0
    %952 = vmatpush1.bf16.msra.mxu0 0
    %953 = vmatprep.subr.bf16.mxu0 0
    %954 = vmatpush1.bf16.msra.mxu0 0
    %955 = vmatprep.subr.bf16.mxu0 0
    %956 = vmatpush1.bf16.msra.mxu0 0
    %957 = vmatprep.subr.bf16.mxu0 0
    %958 = vmatpush1.bf16.msra.mxu0 0
    %959 = vmatprep.subr.bf16.mxu0 0
    %960 = vmatpush1.bf16.msra.mxu0 0
    %961 = vmatprep.subr.bf16.mxu0 0
    %962 = vmatpush1.bf16.msra.mxu0 0
    %963 = vmatprep.subr.bf16.mxu0 0
    %964 = vmatpush1.bf16.msra.mxu0 0
    %965 = vmatprep.subr.bf16.mxu0 0
    %966 = vmatpush1.bf16.msra.mxu0 0
    %967 = vmatprep.subr.bf16.mxu0 0
    %968 = vmatpush1.bf16.msra.mxu0 0
    %969 = vmatprep.subr.bf16.mxu0 0
    %970 = vmatpush1.bf16.msra.mxu0 0
    %971 = vmatprep.subr.bf16.mxu0 0
    %972 = vmatpush1.bf16.msra.mxu0 0
    %973 = vmatprep.subr.bf16.mxu0 0
    %974 = vmatpush1.bf16.msra.mxu0 0
    %975 = vmatprep.mubr.bf16.mxu0 0
    %976 = vmatmul.mubr.bf16.gmra.mrb[0].mxu0 %v941
    %v977 = vpop.f32.mrb[0].mxu0
    %v978 = vadd.f32 0.0, %v977
    %v979 = vpop.f32.mrb[0].mxu0
    %v980 = vpop.f32.mrb[0].mxu0
    %v981 = vpop.f32.mrb[0].mxu0
    %982 = vdwg.mxu0
    %v983 = vld [vmem:[%s2 + $0x1] sm:$0x1]
    %v984 = vpack.c.bf16 %v215, %v215
    %v985 = vpack.c.bf16 %v978, %v978
    %v986 = vlaneseq
    %v987 = vshrl.u32 %v986, 7
    %v988 = vsub.s32 0, %v987
    %v989 = vrot.slane %v983, %v988
    %v991 = vsel %vm294, %v984, 0
    %v994 = vsel %vm294, %v985, 0
    %996 = vmatprep.subr.bf16.mxu0 0
    %997 = vmatpush1.bf16.xpose.msra.mxu0 %v994
    %998 = vmatprep.subr.bf16.mxu0 0
    %999 = vmatpush1.bf16.xpose.msra.mxu0 0
    %1000 = vmatprep.subr.bf16.mxu0 0
    %1001 = vmatpush1.bf16.xpose.msra.mxu0 0
    %1002 = vmatprep.subr.bf16.mxu0 0
    %1003 = vmatpush1.bf16.xpose.msra.mxu0 0
    %1004 = vmatprep.subr.bf16.mxu0 0
    %1005 = vmatpush1.bf16.xpose.msra.mxu0 0
    %1006 = vmatprep.subr.bf16.mxu0 0
    %1007 = vmatpush1.bf16.xpose.msra.mxu0 0
    %1008 = vmatprep.subr.bf16.mxu0 0
    %1009 = vmatpush1.bf16.xpose.msra.mxu0 0
    %1010 = vmatprep.subr.bf16.mxu0 0
    %1011 = vmatpush1.bf16.xpose.msra.mxu0 0
    %1012 = vmatprep.subr.bf16.mxu0 0
    %1013 = vmatpush1.bf16.xpose.msra.mxu0 0
    %1014 = vmatprep.subr.bf16.mxu0 0
    %1015 = vmatpush1.bf16.xpose.msra.mxu0 0
    %1016 = vmatprep.subr.bf16.mxu0 0
    %1017 = vmatpush1.bf16.xpose.msra.mxu0 0
    %1018 = vmatprep.subr.bf16.mxu0 0
    %1019 = vmatpush1.bf16.xpose.msra.mxu0 0
    %1020 = vmatprep.subr.bf16.mxu0 0
    %1021 = vmatpush1.bf16.xpose.msra.mxu0 0
    %1022 = vmatprep.subr.bf16.mxu0 0
    %1023 = vmatpush1.bf16.xpose.msra.mxu0 0
    %1024 = vmatprep.subr.bf16.mxu0 0
    %1025 = vmatpush1.bf16.xpose.msra.mxu0 0
    %1026 = vmatprep.subr.bf16.mxu0 0
    %1027 = vmatpush1.bf16.xpose.msra.mxu0 0
    %1028 = vmatprep.mubr.bf16.mxu0 0
    %1029 = vmatmul.mubr.bf16.gmra.mrb[0].mxu0 %v991
    %v1030 = vpop.f32.mrb[0].mxu0
    %v1031 = vadd.f32 %v989, %v1030
    %v1032 = vpop.f32.mrb[0].mxu0
    %v1033 = vpop.f32.mrb[0].mxu0
    %v1034 = vpop.f32.mrb[0].mxu0
    %1035 = vdwg.mxu0
    %v1036 = vsel %vm341, %v1031, -inf
    %1037 = vmax.xlane.f32.xlu0 %v1036
    %v1038 = vpop.xlane.xlu0 %1037
    %v1039 = vsub.f32 %v1031, %v1038
    %v1040 = vmul.f32 %v1039, 1.442695
    %v1041 = vpow.pop %v1040
    %v1042 = vsel %vm341, %v1041, 0.0
    %1043 = vadd.xlane.f32.xlu0 %v1042
    %v1044 = vpop.xlane.xlu0 %1043
    %v1045 = vrcp.pop %v1044
    %v1046 = vmul.f32 %v1041, %v1045
    %v1047 = vpack.c.bf16 %v1046, %v1046
    %1049 = vrot.lane.b32.xlu0 %v985, 64
    %v1050 = vpop.permute.xlu0 %1049
    %v1052 = vsel %vm341, %v1047, 0
    %v1055 = vsel %vm360, %v1050, 0
    %1057 = vmatprep.subr.bf16.mxu0 0
    %1058 = vmatpush1.bf16.msra.mxu0 %v1055
    %1059 = vmatprep.subr.bf16.mxu0 0
    %1060 = vmatpush1.bf16.msra.mxu0 0
    %1061 = vmatprep.subr.bf16.mxu0 0
    %1062 = vmatpush1.bf16.msra.mxu0 0
    %1063 = vmatprep.subr.bf16.mxu0 0
    %1064 = vmatpush1.bf16.msra.mxu0 0
    %1065 = vmatprep.subr.bf16.mxu0 0
    %1066 = vmatpush1.bf16.msra.mxu0 0
    %1067 = vmatprep.subr.bf16.mxu0 0
    %1068 = vmatpush1.bf16.msra.mxu0 0
    %1069 = vmatprep.subr.bf16.mxu0 0
    %1070 = vmatpush1.bf16.msra.mxu0 0
    %1071 = vmatprep.subr.bf16.mxu0 0
    %1072 = vmatpush1.bf16.msra.mxu0 0
    %1073 = vmatprep.subr.bf16.mxu0 0
    %1074 = vmatpush1.bf16.msra.mxu0 0
    %1075 = vmatprep.subr.bf16.mxu0 0
    %1076 = vmatpush1.bf16.msra.mxu0 0
    %1077 = vmatprep.subr.bf16.mxu0 0
    %1078 = vmatpush1.bf16.msra.mxu0 0
    %1079 = vmatprep.subr.bf16.mxu0 0
    %1080 = vmatpush1.bf16.msra.mxu0 0
    %1081 = vmatprep.subr.bf16.mxu0 0
    %1082 = vmatpush1.bf16.msra.mxu0 0
    %1083 = vmatprep.subr.bf16.mxu0 0
    %1084 = vmatpush1.bf16.msra.mxu0 0
    %1085 = vmatprep.subr.bf16.mxu0 0
    %1086 = vmatpush1.bf16.msra.mxu0 0
    %1087 = vmatprep.subr.bf16.mxu0 0
    %1088 = vmatpush1.bf16.msra.mxu0 0
    %1089 = vmatprep.mubr.bf16.mxu0 0
    %1090 = vmatmul.mubr.bf16.gmra.mrb[0].mxu0 %v1052
    %v1091 = vpop.f32.mrb[0].mxu0
    %v1092 = vadd.f32 0.0, %v1091
    %v1093 = vpop.f32.mrb[0].mxu0
    %v1094 = vpop.f32.mrb[0].mxu0
    %v1095 = vpop.f32.mrb[0].mxu0
    %1096 = vdwg.mxu0
    %v1097 = vpack.c.bf16 %v1092, %v1092
    %1099 = vrot.lane.b32.xlu0 %v984, 112
    %v1100 = vpop.permute.xlu0 %1099
    %1101 = vrot.lane.b32.xlu0 %v985, 112
    %v1102 = vpop.permute.xlu0 %1101
    %v1104 = vsel %vm294, %v1100, 0
    %v1107 = vsel %vm294, %v1102, 0
    %1109 = vmatprep.subr.bf16.mxu0 0
    %1110 = vmatpush1.bf16.xpose.msra.mxu0 %v1107
    %1111 = vmatprep.subr.bf16.mxu0 0
    %1112 = vmatpush1.bf16.xpose.msra.mxu0 0
    %1113 = vmatprep.subr.bf16.mxu0 0
    %1114 = vmatpush1.bf16.xpose.msra.mxu0 0
    %1115 = vmatprep.subr.bf16.mxu0 0
    %1116 = vmatpush1.bf16.xpose.msra.mxu0 0
    %1117 = vmatprep.subr.bf16.mxu0 0
    %1118 = vmatpush1.bf16.xpose.msra.mxu0 0
    %1119 = vmatprep.subr.bf16.mxu0 0
    %1120 = vmatpush1.bf16.xpose.msra.mxu0 0
    %1121 = vmatprep.subr.bf16.mxu0 0
    %1122 = vmatpush1.bf16.xpose.msra.mxu0 0
    %1123 = vmatprep.subr.bf16.mxu0 0
    %1124 = vmatpush1.bf16.xpose.msra.mxu0 0
    %1125 = vmatprep.subr.bf16.mxu0 0
    %1126 = vmatpush1.bf16.xpose.msra.mxu0 0
    %1127 = vmatprep.subr.bf16.mxu0 0
    %1128 = vmatpush1.bf16.xpose.msra.mxu0 0
    %1129 = vmatprep.subr.bf16.mxu0 0
    %1130 = vmatpush1.bf16.xpose.msra.mxu0 0
    %1131 = vmatprep.subr.bf16.mxu0 0
    %1132 = vmatpush1.bf16.xpose.msra.mxu0 0
    %1133 = vmatprep.subr.bf16.mxu0 0
    %1134 = vmatpush1.bf16.xpose.msra.mxu0 0
    %1135 = vmatprep.subr.bf16.mxu0 0
    %1136 = vmatpush1.bf16.xpose.msra.mxu0 0
    %1137 = vmatprep.subr.bf16.mxu0 0
    %1138 = vmatpush1.bf16.xpose.msra.mxu0 0
    %1139 = vmatprep.subr.bf16.mxu0 0
    %1140 = vmatpush1.bf16.xpose.msra.mxu0 0
    %1141 = vmatprep.mubr.bf16.mxu0 0
    %1142 = vmatmul.mubr.bf16.gmra.mrb[0].mxu0 %v1104
    %v1143 = vpop.f32.mrb[0].mxu0
    %v1144 = vadd.f32 %v989, %v1143
    %v1145 = vpop.f32.mrb[0].mxu0
    %v1146 = vpop.f32.mrb[0].mxu0
    %v1147 = vpop.f32.mrb[0].mxu0
    %1148 = vdwg.mxu0
    %v1149 = vsel %vm341, %v1144, -inf
    %1150 = vmax.xlane.f32.xlu0 %v1149
    %v1151 = vpop.xlane.xlu0 %1150
    %v1152 = vsub.f32 %v1144, %v1151
    %v1153 = vmul.f32 %v1152, 1.442695
    %v1154 = vpow.pop %v1153
    %v1155 = vsel %vm341, %v1154, 0.0
    %1156 = vadd.xlane.f32.xlu0 %v1155
    %v1157 = vpop.xlane.xlu0 %1156
    %v1158 = vrcp.pop %v1157
    %v1159 = vmul.f32 %v1154, %v1158
    %v1160 = vpack.c.bf16 %v1159, %v1159
    %1161 = vrot.lane.b32.xlu0 %v985, 48
    %v1162 = vpop.permute.xlu0 %1161
    %v1164 = vsel %vm341, %v1160, 0
    %v1167 = vsel %vm360, %v1162, 0
    %1169 = vmatprep.subr.bf16.mxu0 0
    %1170 = vmatpush1.bf16.msra.mxu0 %v1167
    %1171 = vmatprep.subr.bf16.mxu0 0
    %1172 = vmatpush1.bf16.msra.mxu0 0
    %1173 = vmatprep.subr.bf16.mxu0 0
    %1174 = vmatpush1.bf16.msra.mxu0 0
    %1175 = vmatprep.subr.bf16.mxu0 0
    %1176 = vmatpush1.bf16.msra.mxu0 0
    %1177 = vmatprep.subr.bf16.mxu0 0
    %1178 = vmatpush1.bf16.msra.mxu0 0
    %1179 = vmatprep.subr.bf16.mxu0 0
    %1180 = vmatpush1.bf16.msra.mxu0 0
    %1181 = vmatprep.subr.bf16.mxu0 0
    %1182 = vmatpush1.bf16.msra.mxu0 0
    %1183 = vmatprep.subr.bf16.mxu0 0
    %1184 = vmatpush1.bf16.msra.mxu0 0
    %1185 = vmatprep.subr.bf16.mxu0 0
    %1186 = vmatpush1.bf16.msra.mxu0 0
    %1187 = vmatprep.subr.bf16.mxu0 0
    %1188 = vmatpush1.bf16.msra.mxu0 0
    %1189 = vmatprep.subr.bf16.mxu0 0
    %1190 = vmatpush1.bf16.msra.mxu0 0
    %1191 = vmatprep.subr.bf16.mxu0 0
    %1192 = vmatpush1.bf16.msra.mxu0 0
    %1193 = vmatprep.subr.bf16.mxu0 0
    %1194 = vmatpush1.bf16.msra.mxu0 0
    %1195 = vmatprep.subr.bf16.mxu0 0
    %1196 = vmatpush1.bf16.msra.mxu0 0
    %1197 = vmatprep.subr.bf16.mxu0 0
    %1198 = vmatpush1.bf16.msra.mxu0 0
    %1199 = vmatprep.subr.bf16.mxu0 0
    %1200 = vmatpush1.bf16.msra.mxu0 0
    %1201 = vmatprep.mubr.bf16.mxu0 0
    %1202 = vmatmul.mubr.bf16.gmra.mrb[0].mxu0 %v1164
    %v1203 = vpop.f32.mrb[0].mxu0
    %v1204 = vadd.f32 0.0, %v1203
    %v1205 = vpop.f32.mrb[0].mxu0
    %v1206 = vpop.f32.mrb[0].mxu0
    %v1207 = vpop.f32.mrb[0].mxu0
    %1208 = vdwg.mxu0
    %v1209 = vpack.c.bf16 %v1204, %v1204
    %v1211 = vsel %vm294, %v1209, 0
    %1213 = vmatprep.subr.bf16.mxu0 0
    %1214 = vmatpush1.bf16.msra.mxu0 %v521
    %1215 = vmatprep.subr.bf16.mxu0 0
    %1216 = vmatpush1.bf16.msra.mxu0 0
    %1217 = vmatprep.subr.bf16.mxu0 0
    %1218 = vmatpush1.bf16.msra.mxu0 0
    %1219 = vmatprep.subr.bf16.mxu0 0
    %1220 = vmatpush1.bf16.msra.mxu0 0
    %1221 = vmatprep.subr.bf16.mxu0 0
    %1222 = vmatpush1.bf16.msra.mxu0 0
    %1223 = vmatprep.subr.bf16.mxu0 0
    %1224 = vmatpush1.bf16.msra.mxu0 0
    %1225 = vmatprep.subr.bf16.mxu0 0
    %1226 = vmatpush1.bf16.msra.mxu0 0
    %1227 = vmatprep.subr.bf16.mxu0 0
    %1228 = vmatpush1.bf16.msra.mxu0 0
    %1229 = vmatprep.subr.bf16.mxu0 0
    %1230 = vmatpush1.bf16.msra.mxu0 0
    %1231 = vmatprep.subr.bf16.mxu0 0
    %1232 = vmatpush1.bf16.msra.mxu0 0
    %1233 = vmatprep.subr.bf16.mxu0 0
    %1234 = vmatpush1.bf16.msra.mxu0 0
    %1235 = vmatprep.subr.bf16.mxu0 0
    %1236 = vmatpush1.bf16.msra.mxu0 0
    %1237 = vmatprep.subr.bf16.mxu0 0
    %1238 = vmatpush1.bf16.msra.mxu0 0
    %1239 = vmatprep.subr.bf16.mxu0 0
    %1240 = vmatpush1.bf16.msra.mxu0 0
    %1241 = vmatprep.subr.bf16.mxu0 0
    %1242 = vmatpush1.bf16.msra.mxu0 0
    %1243 = vmatprep.subr.bf16.mxu0 0
    %1244 = vmatpush1.bf16.msra.mxu0 0
    %1245 = vmatprep.mubr.bf16.mxu0 0
    %1246 = vmatmul.mubr.bf16.gmra.mrb[0].mxu0 %v1211
    %v1247 = vpop.f32.mrb[0].mxu0
    %v1248 = vadd.f32 0.0, %v1247
    %v1249 = vpop.f32.mrb[0].mxu0
    %v1250 = vpop.f32.mrb[0].mxu0
    %v1251 = vpop.f32.mrb[0].mxu0
    %1252 = vdwg.mxu0
    %v1254 = vsel %vm294, %v1097, 0
    %1256 = vmatprep.subr.bf16.mxu0 0
    %1257 = vmatpush1.bf16.msra.mxu0 %v570
    %1258 = vmatprep.subr.bf16.mxu0 0
    %1259 = vmatpush1.bf16.msra.mxu0 0
    %1260 = vmatprep.subr.bf16.mxu0 0
    %1261 = vmatpush1.bf16.msra.mxu0 0
    %1262 = vmatprep.subr.bf16.mxu0 0
    %1263 = vmatpush1.bf16.msra.mxu0 0
    %1264 = vmatprep.subr.bf16.mxu0 0
    %1265 = vmatpush1.bf16.msra.mxu0 0
    %1266 = vmatprep.subr.bf16.mxu0 0
    %1267 = vmatpush1.bf16.msra.mxu0 0
    %1268 = vmatprep.subr.bf16.mxu0 0
    %1269 = vmatpush1.bf16.msra.mxu0 0
    %1270 = vmatprep.subr.bf16.mxu0 0
    %1271 = vmatpush1.bf16.msra.mxu0 0
    %1272 = vmatprep.subr.bf16.mxu0 0
    %1273 = vmatpush1.bf16.msra.mxu0 0
    %1274 = vmatprep.subr.bf16.mxu0 0
    %1275 = vmatpush1.bf16.msra.mxu0 0
    %1276 = vmatprep.subr.bf16.mxu0 0
    %1277 = vmatpush1.bf16.msra.mxu0 0
    %1278 = vmatprep.subr.bf16.mxu0 0
    %1279 = vmatpush1.bf16.msra.mxu0 0
    %1280 = vmatprep.subr.bf16.mxu0 0
    %1281 = vmatpush1.bf16.msra.mxu0 0
    %1282 = vmatprep.subr.bf16.mxu0 0
    %1283 = vmatpush1.bf16.msra.mxu0 0
    %1284 = vmatprep.subr.bf16.mxu0 0
    %1285 = vmatpush1.bf16.msra.mxu0 0
    %1286 = vmatprep.subr.bf16.mxu0 0
    %1287 = vmatpush1.bf16.msra.mxu0 0
    %1288 = vmatprep.mubr.bf16.mxu0 0
    %1289 = vmatmul.mubr.bf16.gmra.mrb[0].mxu0 %v1254
    %v1290 = vpop.f32.mrb[0].mxu0
    %v1291 = vadd.f32 %v1248, %v1290
    %v1292 = vpop.f32.mrb[0].mxu0
    %v1293 = vpop.f32.mrb[0].mxu0
    %v1294 = vpop.f32.mrb[0].mxu0
    %1295 = vdwg.mxu0
    %1296 = vrot.lane.b32.xlu0 %v984, 96
    %v1297 = vpop.permute.xlu0 %1296
    %1298 = vrot.lane.b32.xlu0 %v985, 96
    %v1299 = vpop.permute.xlu0 %1298
    %v1301 = vsel %vm294, %v1297, 0
    %v1304 = vsel %vm294, %v1299, 0
    %1306 = vmatprep.subr.bf16.mxu0 0
    %1307 = vmatpush1.bf16.xpose.msra.mxu0 %v1304
    %1308 = vmatprep.subr.bf16.mxu0 0
    %1309 = vmatpush1.bf16.xpose.msra.mxu0 0
    %1310 = vmatprep.subr.bf16.mxu0 0
    %1311 = vmatpush1.bf16.xpose.msra.mxu0 0
    %1312 = vmatprep.subr.bf16.mxu0 0
    %1313 = vmatpush1.bf16.xpose.msra.mxu0 0
    %1314 = vmatprep.subr.bf16.mxu0 0
    %1315 = vmatpush1.bf16.xpose.msra.mxu0 0
    %1316 = vmatprep.subr.bf16.mxu0 0
    %1317 = vmatpush1.bf16.xpose.msra.mxu0 0
    %1318 = vmatprep.subr.bf16.mxu0 0
    %1319 = vmatpush1.bf16.xpose.msra.mxu0 0
    %1320 = vmatprep.subr.bf16.mxu0 0
    %1321 = vmatpush1.bf16.xpose.msra.mxu0 0
    %1322 = vmatprep.subr.bf16.mxu0 0
    %1323 = vmatpush1.bf16.xpose.msra.mxu0 0
    %1324 = vmatprep.subr.bf16.mxu0 0
    %1325 = vmatpush1.bf16.xpose.msra.mxu0 0
    %1326 = vmatprep.subr.bf16.mxu0 0
    %1327 = vmatpush1.bf16.xpose.msra.mxu0 0
    %1328 = vmatprep.subr.bf16.mxu0 0
    %1329 = vmatpush1.bf16.xpose.msra.mxu0 0
    %1330 = vmatprep.subr.bf16.mxu0 0
    %1331 = vmatpush1.bf16.xpose.msra.mxu0 0
    %1332 = vmatprep.subr.bf16.mxu0 0
    %1333 = vmatpush1.bf16.xpose.msra.mxu0 0
    %1334 = vmatprep.subr.bf16.mxu0 0
    %1335 = vmatpush1.bf16.xpose.msra.mxu0 0
    %1336 = vmatprep.subr.bf16.mxu0 0
    %1337 = vmatpush1.bf16.xpose.msra.mxu0 0
    %1338 = vmatprep.mubr.bf16.mxu0 0
    %1339 = vmatmul.mubr.bf16.gmra.mrb[0].mxu0 %v1301
    %v1340 = vpop.f32.mrb[0].mxu0
    %v1341 = vadd.f32 %v989, %v1340
    %v1342 = vpop.f32.mrb[0].mxu0
    %v1343 = vpop.f32.mrb[0].mxu0
    %v1344 = vpop.f32.mrb[0].mxu0
    %1345 = vdwg.mxu0
    %v1346 = vsel %vm341, %v1341, -inf
    %1347 = vmax.xlane.f32.xlu0 %v1346
    %v1348 = vpop.xlane.xlu0 %1347
    %v1349 = vsub.f32 %v1341, %v1348
    %v1350 = vmul.f32 %v1349, 1.442695
    %v1351 = vpow.pop %v1350
    %v1352 = vsel %vm341, %v1351, 0.0
    %1353 = vadd.xlane.f32.xlu0 %v1352
    %v1354 = vpop.xlane.xlu0 %1353
    %v1355 = vrcp.pop %v1354
    %v1356 = vmul.f32 %v1351, %v1355
    %v1357 = vpack.c.bf16 %v1356, %v1356
    %1358 = vrot.lane.b32.xlu0 %v985, 32
    %v1359 = vpop.permute.xlu0 %1358
    %v1361 = vsel %vm341, %v1357, 0
    %v1364 = vsel %vm360, %v1359, 0
    %1366 = vmatprep.subr.bf16.mxu0 0
    %1367 = vmatpush1.bf16.msra.mxu0 %v1364
    %1368 = vmatprep.subr.bf16.mxu0 0
    %1369 = vmatpush1.bf16.msra.mxu0 0
    %1370 = vmatprep.subr.bf16.mxu0 0
    %1371 = vmatpush1.bf16.msra.mxu0 0
    %1372 = vmatprep.subr.bf16.mxu0 0
    %1373 = vmatpush1.bf16.msra.mxu0 0
    %1374 = vmatprep.subr.bf16.mxu0 0
    %1375 = vmatpush1.bf16.msra.mxu0 0
    %1376 = vmatprep.subr.bf16.mxu0 0
    %1377 = vmatpush1.bf16.msra.mxu0 0
    %1378 = vmatprep.subr.bf16.mxu0 0
    %1379 = vmatpush1.bf16.msra.mxu0 0
    %1380 = vmatprep.subr.bf16.mxu0 0
    %1381 = vmatpush1.bf16.msra.mxu0 0
    %1382 = vmatprep.subr.bf16.mxu0 0
    %1383 = vmatpush1.bf16.msra.mxu0 0
    %1384 = vmatprep.subr.bf16.mxu0 0
    %1385 = vmatpush1.bf16.msra.mxu0 0
    %1386 = vmatprep.subr.bf16.mxu0 0
    %1387 = vmatpush1.bf16.msra.mxu0 0
    %1388 = vmatprep.subr.bf16.mxu0 0
    %1389 = vmatpush1.bf16.msra.mxu0 0
    %1390 = vmatprep.subr.bf16.mxu0 0
    %1391 = vmatpush1.bf16.msra.mxu0 0
    %1392 = vmatprep.subr.bf16.mxu0 0
    %1393 = vmatpush1.bf16.msra.mxu0 0
    %1394 = vmatprep.subr.bf16.mxu0 0
    %1395 = vmatpush1.bf16.msra.mxu0 0
    %1396 = vmatprep.subr.bf16.mxu0 0
    %1397 = vmatpush1.bf16.msra.mxu0 0
    %1398 = vmatprep.mubr.bf16.mxu0 0
    %1399 = vmatmul.mubr.bf16.gmra.mrb[0].mxu0 %v1361
    %v1400 = vpop.f32.mrb[0].mxu0
    %v1401 = vadd.f32 0.0, %v1400
    %v1402 = vpop.f32.mrb[0].mxu0
    %v1403 = vpop.f32.mrb[0].mxu0
    %v1404 = vpop.f32.mrb[0].mxu0
    %1405 = vdwg.mxu0
    %v1406 = vpack.c.bf16 %v1401, %v1401
    %v1408 = vsel %vm294, %v1406, 0
    %1410 = vmatprep.subr.bf16.mxu0 0
    %1411 = vmatpush1.bf16.msra.mxu0 %v730
    %1412 = vmatprep.subr.bf16.mxu0 0
    %1413 = vmatpush1.bf16.msra.mxu0 0
    %1414 = vmatprep.subr.bf16.mxu0 0
    %1415 = vmatpush1.bf16.msra.mxu0 0
    %1416 = vmatprep.subr.bf16.mxu0 0
    %1417 = vmatpush1.bf16.msra.mxu0 0
    %1418 = vmatprep.subr.bf16.mxu0 0
    %1419 = vmatpush1.bf16.msra.mxu0 0
    %1420 = vmatprep.subr.bf16.mxu0 0
    %1421 = vmatpush1.bf16.msra.mxu0 0
    %1422 = vmatprep.subr.bf16.mxu0 0
    %1423 = vmatpush1.bf16.msra.mxu0 0
    %1424 = vmatprep.subr.bf16.mxu0 0
    %1425 = vmatpush1.bf16.msra.mxu0 0
    %1426 = vmatprep.subr.bf16.mxu0 0
    %1427 = vmatpush1.bf16.msra.mxu0 0
    %1428 = vmatprep.subr.bf16.mxu0 0
    %1429 = vmatpush1.bf16.msra.mxu0 0
    %1430 = vmatprep.subr.bf16.mxu0 0
    %1431 = vmatpush1.bf16.msra.mxu0 0
    %1432 = vmatprep.subr.bf16.mxu0 0
    %1433 = vmatpush1.bf16.msra.mxu0 0
    %1434 = vmatprep.subr.bf16.mxu0 0
    %1435 = vmatpush1.bf16.msra.mxu0 0
    %1436 = vmatprep.subr.bf16.mxu0 0
    %1437 = vmatpush1.bf16.msra.mxu0 0
    %1438 = vmatprep.subr.bf16.mxu0 0
    %1439 = vmatpush1.bf16.msra.mxu0 0
    %1440 = vmatprep.subr.bf16.mxu0 0
    %1441 = vmatpush1.bf16.msra.mxu0 0
    %1442 = vmatprep.mubr.bf16.mxu0 0
    %1443 = vmatmul.mubr.bf16.gmra.mrb[0].mxu0 %v1408
    %v1444 = vpop.f32.mrb[0].mxu0
    %v1445 = vadd.f32 0.0, %v1444
    %v1446 = vpop.f32.mrb[0].mxu0
    %v1447 = vpop.f32.mrb[0].mxu0
    %v1448 = vpop.f32.mrb[0].mxu0
    %1449 = vdwg.mxu0
    %v1450 = vadd.f32 %v1291, %v1445
    %1451 = vrot.lane.b32.xlu0 %v984, 80
    %v1452 = vpop.permute.xlu0 %1451
    %1453 = vrot.lane.b32.xlu0 %v985, 80
    %v1454 = vpop.permute.xlu0 %1453
    %v1456 = vsel %vm294, %v1452, 0
    %v1459 = vsel %vm294, %v1454, 0
    %1461 = vmatprep.subr.bf16.mxu0 0
    %1462 = vmatpush1.bf16.xpose.msra.mxu0 %v1459
    %1463 = vmatprep.subr.bf16.mxu0 0
    %1464 = vmatpush1.bf16.xpose.msra.mxu0 0
    %1465 = vmatprep.subr.bf16.mxu0 0
    %1466 = vmatpush1.bf16.xpose.msra.mxu0 0
    %1467 = vmatprep.subr.bf16.mxu0 0
    %1468 = vmatpush1.bf16.xpose.msra.mxu0 0
    %1469 = vmatprep.subr.bf16.mxu0 0
    %1470 = vmatpush1.bf16.xpose.msra.mxu0 0
    %1471 = vmatprep.subr.bf16.mxu0 0
    %1472 = vmatpush1.bf16.xpose.msra.mxu0 0
    %1473 = vmatprep.subr.bf16.mxu0 0
    %1474 = vmatpush1.bf16.xpose.msra.mxu0 0
    %1475 = vmatprep.subr.bf16.mxu0 0
    %1476 = vmatpush1.bf16.xpose.msra.mxu0 0
    %1477 = vmatprep.subr.bf16.mxu0 0
    %1478 = vmatpush1.bf16.xpose.msra.mxu0 0
    %1479 = vmatprep.subr.bf16.mxu0 0
    %1480 = vmatpush1.bf16.xpose.msra.mxu0 0
    %1481 = vmatprep.subr.bf16.mxu0 0
    %1482 = vmatpush1.bf16.xpose.msra.mxu0 0
    %1483 = vmatprep.subr.bf16.mxu0 0
    %1484 = vmatpush1.bf16.xpose.msra.mxu0 0
    %1485 = vmatprep.subr.bf16.mxu0 0
    %1486 = vmatpush1.bf16.xpose.msra.mxu0 0
    %1487 = vmatprep.subr.bf16.mxu0 0
    %1488 = vmatpush1.bf16.xpose.msra.mxu0 0
    %1489 = vmatprep.subr.bf16.mxu0 0
    %1490 = vmatpush1.bf16.xpose.msra.mxu0 0
    %1491 = vmatprep.subr.bf16.mxu0 0
    %1492 = vmatpush1.bf16.xpose.msra.mxu0 0
    %1493 = vmatprep.mubr.bf16.mxu0 0
    %1494 = vmatmul.mubr.bf16.gmra.mrb[0].mxu0 %v1456
    %v1495 = vpop.f32.mrb[0].mxu0
    %v1496 = vadd.f32 %v989, %v1495
    %v1497 = vpop.f32.mrb[0].mxu0
    %v1498 = vpop.f32.mrb[0].mxu0
    %v1499 = vpop.f32.mrb[0].mxu0
    %1500 = vdwg.mxu0
    %v1501 = vsel %vm341, %v1496, -inf
    %1502 = vmax.xlane.f32.xlu0 %v1501
    %v1503 = vpop.xlane.xlu0 %1502
    %v1504 = vsub.f32 %v1496, %v1503
    %v1505 = vmul.f32 %v1504, 1.442695
    %v1506 = vpow.pop %v1505
    %v1507 = vsel %vm341, %v1506, 0.0
    %1508 = vadd.xlane.f32.xlu0 %v1507
    %v1509 = vpop.xlane.xlu0 %1508
    %v1510 = vrcp.pop %v1509
    %v1511 = vmul.f32 %v1506, %v1510
    %v1512 = vpack.c.bf16 %v1511, %v1511
    %1513 = vrot.lane.b32.xlu0 %v985, 16
    %v1514 = vpop.permute.xlu0 %1513
    %v1516 = vsel %vm341, %v1512, 0
    %v1519 = vsel %vm360, %v1514, 0
    %1521 = vmatprep.subr.bf16.mxu0 0
    %1522 = vmatpush1.bf16.msra.mxu0 %v1519
    %1523 = vmatprep.subr.bf16.mxu0 0
    %1524 = vmatpush1.bf16.msra.mxu0 0
    %1525 = vmatprep.subr.bf16.mxu0 0
    %1526 = vmatpush1.bf16.msra.mxu0 0
    %1527 = vmatprep.subr.bf16.mxu0 0
    %1528 = vmatpush1.bf16.msra.mxu0 0
    %1529 = vmatprep.subr.bf16.mxu0 0
    %1530 = vmatpush1.bf16.msra.mxu0 0
    %1531 = vmatprep.subr.bf16.mxu0 0
    %1532 = vmatpush1.bf16.msra.mxu0 0
    %1533 = vmatprep.subr.bf16.mxu0 0
    %1534 = vmatpush1.bf16.msra.mxu0 0
    %1535 = vmatprep.subr.bf16.mxu0 0
    %1536 = vmatpush1.bf16.msra.mxu0 0
    %1537 = vmatprep.subr.bf16.mxu0 0
    %1538 = vmatpush1.bf16.msra.mxu0 0
    %1539 = vmatprep.subr.bf16.mxu0 0
    %1540 = vmatpush1.bf16.msra.mxu0 0
    %1541 = vmatprep.subr.bf16.mxu0 0
    %1542 = vmatpush1.bf16.msra.mxu0 0
    %1543 = vmatprep.subr.bf16.mxu0 0
    %1544 = vmatpush1.bf16.msra.mxu0 0
    %1545 = vmatprep.subr.bf16.mxu0 0
    %1546 = vmatpush1.bf16.msra.mxu0 0
    %1547 = vmatprep.subr.bf16.mxu0 0
    %1548 = vmatpush1.bf16.msra.mxu0 0
    %1549 = vmatprep.subr.bf16.mxu0 0
    %1550 = vmatpush1.bf16.msra.mxu0 0
    %1551 = vmatprep.subr.bf16.mxu0 0
    %1552 = vmatpush1.bf16.msra.mxu0 0
    %1553 = vmatprep.mubr.bf16.mxu0 0
    %1554 = vmatmul.mubr.bf16.gmra.mrb[0].mxu0 %v1516
    %v1555 = vpop.f32.mrb[0].mxu0
    %v1556 = vadd.f32 0.0, %v1555
    %v1557 = vpop.f32.mrb[0].mxu0
    %v1558 = vpop.f32.mrb[0].mxu0
    %v1559 = vpop.f32.mrb[0].mxu0
    %1560 = vdwg.mxu0
    %v1561 = vpack.c.bf16 %v1556, %v1556
    %v1563 = vsel %vm294, %v1561, 0
    %1565 = vmatprep.subr.bf16.mxu0 0
    %1566 = vmatpush1.bf16.msra.mxu0 %v891
    %1567 = vmatprep.subr.bf16.mxu0 0
    %1568 = vmatpush1.bf16.msra.mxu0 0
    %1569 = vmatprep.subr.bf16.mxu0 0
    %1570 = vmatpush1.bf16.msra.mxu0 0
    %1571 = vmatprep.subr.bf16.mxu0 0
    %1572 = vmatpush1.bf16.msra.mxu0 0
    %1573 = vmatprep.subr.bf16.mxu0 0
    %1574 = vmatpush1.bf16.msra.mxu0 0
    %1575 = vmatprep.subr.bf16.mxu0 0
    %1576 = vmatpush1.bf16.msra.mxu0 0
    %1577 = vmatprep.subr.bf16.mxu0 0
    %1578 = vmatpush1.bf16.msra.mxu0 0
    %1579 = vmatprep.subr.bf16.mxu0 0
    %1580 = vmatpush1.bf16.msra.mxu0 0
    %1581 = vmatprep.subr.bf16.mxu0 0
    %1582 = vmatpush1.bf16.msra.mxu0 0
    %1583 = vmatprep.subr.bf16.mxu0 0
    %1584 = vmatpush1.bf16.msra.mxu0 0
    %1585 = vmatprep.subr.bf16.mxu0 0
    %1586 = vmatpush1.bf16.msra.mxu0 0
    %1587 = vmatprep.subr.bf16.mxu0 0
    %1588 = vmatpush1.bf16.msra.mxu0 0
    %1589 = vmatprep.subr.bf16.mxu0 0
    %1590 = vmatpush1.bf16.msra.mxu0 0
    %1591 = vmatprep.subr.bf16.mxu0 0
    %1592 = vmatpush1.bf16.msra.mxu0 0
    %1593 = vmatprep.subr.bf16.mxu0 0
    %1594 = vmatpush1.bf16.msra.mxu0 0
    %1595 = vmatprep.subr.bf16.mxu0 0
    %1596 = vmatpush1.bf16.msra.mxu0 0
    %1597 = vmatprep.mubr.bf16.mxu0 0
    %1598 = vmatmul.mubr.bf16.gmra.mrb[0].mxu0 %v1563
    %v1599 = vpop.f32.mrb[0].mxu0
    %v1600 = vadd.f32 0.0, %v1599
    %v1601 = vpop.f32.mrb[0].mxu0
    %v1602 = vpop.f32.mrb[0].mxu0
    %v1603 = vpop.f32.mrb[0].mxu0
    %1604 = vdwg.mxu0
    %v1605 = vadd.f32 %v1450, %v1600
    %1606 = vst [vmem:[#allocation13 + $0x8] sm:$0xff] %v1605
    // Predicated region
    $region58: #{tpu_custom_call.1} parent=1 // pred_check
      _
    $region59: #{tpu_custom_call.1} parent=1 // pred_check_branch
      %1608 = sbr.rel (0) target = $region61
    $region60: #{tpu_custom_call.1} parent=1 // pred_region
      %s1610 = ssub.s32 256, 256
      %1611 = vsyncadd [#allocation4], %s1610
      %s1612 = sshll.u32 [#allocation13], 4
      %s1613 = int_to_ptr.vmem [resolvable:$true] %s1612
      %1618 = dma.vmem_to_hbm [thread:$0]  %s1613, 256, %s8, [#allocation4], 128, 128, 8
    $region61: #{tpu_custom_call.1} parent=1 // pred_fallthru
      _
    // Predicated region
    $region62: #{tpu_custom_call.1} parent=1 // pred_check
      _
    $region63: #{tpu_custom_call.1} parent=1 // pred_check_branch
      %1620 = sbr.rel (0) target = $region65
    $region64: #{tpu_custom_call.1} parent=1 // pred_region
      %1621 = dma.done [#allocation4], 256
    $region65: #{tpu_custom_call.1} parent=1 // pred_fallthru
      _
    %1622 = vsyncpa [#allocation3], 1
    %1623 = vsyncpa [#allocation6], 1
    %1624 = vsyncpa [#allocation9], 1
    %1625 = vsyncpa [#allocation12], 1
    %1626 = vsyncpa [#allocation4], 1

</llo_original>
